<compile_context>
chip_gen: v7x
topology: tpu7x:2x2x1
jax: 0.10.0
libtpu: 0.0.40
codegen_flags: <defaults>
</compile_context>

<pallas_src>
import math
import functools

import jax
import jax.numpy as jnp
from jax.experimental import pallas as pl
from jax.experimental.pallas import tpu as pltpu


# ----------------------------- helpers ---------------------------------------

def _tpu_vmem_capacity_bytes():
    try:
        return int(pltpu.get_tpu_info().vmem_capacity_bytes)
    except Exception:
        return 64 * 1024 * 1024  # conservative default (v7x per-core VMEM)


def _vmem_limit_bytes(est_bytes, cap):
    ceiling = int(cap * 0.85)          # stay safely below physical VMEM
    want = int(est_bytes * 1.4)        # headroom for Mosaic-internal scratch
    floor = min(16 * 1024 * 1024, ceiling)
    return max(min(want, ceiling), floor)


def _pick_tile(n, cap):
    # Larger tiles on 128-MiB parts (v5e/v6e); cap at 256 on v7x (64 MiB VMEM).
    candidates = (512, 256, 128) if cap >= 100 * 1024 * 1024 else (256, 128)
    for c in candidates:
        if n % c == 0:
            return c
    # Fall back to the largest divisor of n that keeps (8, 128) tiling legal.
    for d in range(min(n, candidates[0]), 0, -1):
        if n % d == 0 and d % 8 == 0:
            return d
    return n  # full (untiled) extent is always legal


# ------------------------ Stage 1: fused QKV projection ----------------------

def _qkv_proj_kernel(x_ref, w_ref, b_ref, o_ref):
    acc = jnp.dot(x_ref[...], w_ref[...], preferred_element_type=jnp.float32)
    o_ref[...] = (acc + b_ref[...]).astype(o_ref.dtype)


def _qkv_projection(x_bf, wqkv, bqkv, tp, cap):
    B, T, C = x_bf.shape
    C3 = wqkv.shape[1]
    est = (2 * tp * C * 2             # x tile (double-buffered, bf16)
           + C * C3 * 2               # fused weights (single-buffered, bf16)
           + max(C3, 128) * 8 * 4     # bias (padded)
           + 2 * tp * C3 * 2)         # output tile (double-buffered, bf16)
    return pl.pallas_call(
        _qkv_proj_kernel,
        out_shape=jax.ShapeDtypeStruct((B, T, C3), jnp.bfloat16),
        grid_spec=pltpu.PrefetchScalarGridSpec(
            num_scalar_prefetch=0,
            grid=(B, T // tp),
            in_specs=[
                pl.BlockSpec((pl.Squeezed(), tp, C), lambda b, i: (b, i, 0)),
                pl.BlockSpec((C, C3), lambda b, i: (0, 0),
                             pipeline_mode=pl.Buffered(1)),
                pl.BlockSpec((1, C3), lambda b, i: (0, 0),
                             pipeline_mode=pl.Buffered(1)),
            ],
            out_specs=pl.BlockSpec((pl.Squeezed(), tp, C3),
                                   lambda b, i: (b, i, 0)),
        ),
        compiler_params=pltpu.CompilerParams(
            dimension_semantics=("parallel", "parallel"),
            vmem_limit_bytes=_vmem_limit_bytes(est, cap),
        ),
    )(x_bf, wqkv, bqkv)


# ------------------------ Stage 2: flash attention + out-proj ----------------

def _attn_kernel(q_ref, k_ref, v_ref, wo_ref, bo_ref, o_ref,
                 m_scr, l_scr, acc_scr, ctx_scr, *, num_heads, head_dim):
    ki = pl.program_id(2)

    @pl.when(ki == 0)
    def _init():
        m_scr[...] = jnp.full(m_scr.shape, -jnp.inf, m_scr.dtype)
        l_scr[...] = jnp.zeros(l_scr.shape, l_scr.dtype)
        acc_scr[...] = jnp.zeros(acc_scr.shape, acc_scr.dtype)

    q = q_ref[...]                      # (H, tq, Dh) bf16, score scale pre-folded
    k = k_ref[...]                      # (H, tk, Dh) bf16
    v = v_ref[...]                      # (H, tk, Dh) bf16

    # Batched over heads; contracts last dims directly (no explicit transpose).
    s = jnp.einsum("hqd,hkd->hqk", q, k,
                   preferred_element_type=jnp.float32)        # (H, tq, tk) f32

    m_prev = m_scr[...]
    m_new = jnp.maximum(m_prev, jnp.max(s, axis=-1, keepdims=True))
    alpha = jnp.exp(m_prev - m_new)                           # f32 exp (v5e-safe)
    p = jnp.exp(s - m_new)
    l_scr[...] = alpha * l_scr[...] + jnp.sum(p, axis=-1, keepdims=True)
    acc_scr[...] = alpha * acc_scr[...] + jnp.einsum(
        "hqk,hkd->hqd", p.astype(v.dtype), v,
        preferred_element_type=jnp.float32)
    m_scr[...] = m_new

    @pl.when(ki == pl.num_programs(2) - 1)
    def _finalize():
        # Exact normalization; runs once per query tile so cost is negligible.
        ctx = (acc_scr[...] / l_scr[...]).astype(ctx_scr.dtype)   # (H, tq, Dh)
        for h in range(num_heads):                                 # finalize-only
            ctx_scr[:, h * head_dim:(h + 1) * head_dim] = ctx[h]
        out = jnp.dot(ctx_scr[...], wo_ref[...],
                      preferred_element_type=jnp.float32) + bo_ref[...]
        o_ref[...] = out.astype(o_ref.dtype)

    # TODO(synk): optional attention `mask` argument not implemented (mask=None only).


# ------------------------------ wrapper ---------------------------------------

@functools.partial(jax.jit, static_argnames=("num_heads",))
def multi_head_self_attention(x, params, num_heads):
    """x: (B, T, C) float32. params: dict of (in,out)-layout weights. Returns (B, T, C)."""
    B, T, C = x.shape
    assert C % num_heads == 0
    head_dim = C // num_heads
    scale = 1.0 / math.sqrt(head_dim)

    cap = _tpu_vmem_capacity_bytes()

    # Fold the 1/sqrt(Dh) score scale into Q; fuse Q|K|V weights into one matmul.
    wqkv = jnp.concatenate(
        [params["wq"] * scale, params["wk"], params["wv"]], axis=1
    ).astype(jnp.bfloat16)                                            # (C, 3C)
    bqkv = jnp.concatenate(
        [params["bq"] * scale, params["bk"], params["bv"]], axis=1
    ).astype(jnp.float32)                                             # (1, 3C)
    wo = params["wo"].astype(jnp.bfloat16)
    bo = params["bo"].astype(jnp.float32)

    x_bf = x.astype(jnp.bfloat16)

    # Stage 1: project Q, K, V exactly once (no per-(qi, ki) recomputation).
    tp = _pick_tile(T, cap)
    qkv = _qkv_projection(x_bf, wqkv, bqkv, tp, cap)                  # (B, T, 3C) bf16

    # Head-major layouts so per-head access in the kernel needs no lane slicing.
    def to_heads(a):                                                  # (B,T,C)->(B,H,T,Dh)
        return a.reshape(B, T, num_heads, head_dim).transpose(0, 2, 1, 3)

    q_h = to_heads(qkv[..., :C])
    k_h = to_heads(qkv[..., C:2 * C])
    v_h = to_heads(qkv[..., 2 * C:])

    tq = _pick_tile(T, cap)
    tk = _pick_tile(T, cap)
    grid = (B, T // tq, T // tk)

    est = (2 * num_heads * tq * head_dim * 2            # q tiles (dbl-buf, bf16)
           + 2 * 2 * num_heads * tk * head_dim * 2      # k, v tiles
           + C * C * 2 + max(C, 128) * 8 * 4            # wo, bo (single-buffered)
           + 2 * tq * C * 4                             # output tile (f32)
           + 2 * num_heads * tq * 128 * 4               # m, l scratch (lane-padded)
           + num_heads * tq * max(head_dim, 128) * 4    # acc scratch
           + tq * max(C, 128) * 2)                      # ctx scratch (bf16)

    kernel = functools.partial(_attn_kernel, num_heads=num_heads, head_dim=head_dim)

    return pl.pallas_call(
        kernel,
        out_shape=jax.ShapeDtypeStruct((B, T, C), x.dtype),
        grid_spec=pltpu.PrefetchScalarGridSpec(
            num_scalar_prefetch=0,
            grid=grid,
            in_specs=[
                pl.BlockSpec((pl.Squeezed(), num_heads, tq, head_dim),
                             lambda b, qi, ki: (b, 0, qi, 0)),        # Q (head-major)
                pl.BlockSpec((pl.Squeezed(), num_heads, tk, head_dim),
                             lambda b, qi, ki: (b, 0, ki, 0)),        # K
                pl.BlockSpec((pl.Squeezed(), num_heads, tk, head_dim),
                             lambda b, qi, ki: (b, 0, ki, 0)),        # V
                pl.BlockSpec((C, C), lambda b, qi, ki: (0, 0),
                             pipeline_mode=pl.Buffered(1)),           # wo
                pl.BlockSpec((1, C), lambda b, qi, ki: (0, 0),
                             pipeline_mode=pl.Buffered(1)),           # bo
            ],
            out_specs=pl.BlockSpec((pl.Squeezed(), tq, C),
                                   lambda b, qi, ki: (b, qi, 0)),
            scratch_shapes=[
                pltpu.VMEM((num_heads, tq, 1), jnp.float32),          # running max
                pltpu.VMEM((num_heads, tq, 1), jnp.float32),          # running denom
                pltpu.VMEM((num_heads, tq, head_dim), jnp.float32),   # running context
                pltpu.VMEM((tq, C), jnp.bfloat16),                    # lane-dense ctx
            ],
        ),
        compiler_params=pltpu.CompilerParams(
            dimension_semantics=("parallel", "parallel", "arbitrary"),
            vmem_limit_bytes=_vmem_limit_bytes(est, cap),
        ),
    )(q_h, k_h, v_h, wo, bo)


# ------------------------------ test harness ----------------------------------

def _init_params(key, embed_dim):
    """Deterministic init mimicking nn.Linear's uniform(-1/sqrt(in), 1/sqrt(in))."""
    bound = 1.0 / math.sqrt(embed_dim)
    keys = jax.random.split(key, 8)

    def u(k, shape):
        return jax.random.uniform(k, shape, jnp.float32, minval=-bound, maxval=bound)

    return {
        "wq": u(keys[0], (embed_dim, embed_dim)),  # (in, out) layout
        "wk": u(keys[1], (embed_dim, embed_dim)),
        "wv": u(keys[2], (embed_dim, embed_dim)),
        "wo": u(keys[3], (embed_dim, embed_dim)),
        "bq": u(keys[4], (1, embed_dim)),
        "bk": u(keys[5], (1, embed_dim)),
        "bv": u(keys[6], (1, embed_dim)),
        "bo": u(keys[7], (1, embed_dim)),
    }


def _reference(x, params, num_heads):
    """Pure-JAX f32 reference replicating the PyTorch forward."""
    B, T, C = x.shape
    Dh = C // num_heads
    q = x @ params["wq"] + params["bq"]
    k = x @ params["wk"] + params["bk"]
    v = x @ params["wv"] + params["bv"]

    def split(a):  # (B, T, C) -> (B, H, T, Dh)
        return a.reshape(B, T, num_heads, Dh).transpose(0, 2, 1, 3)

    q, k, v = split(q), split(k), split(v)
    scores = jnp.einsum("bhqd,bhkd->bhqk", q, k) / math.sqrt(Dh)
    attn = jax.nn.softmax(scores, axis=-1)
    ctx = jnp.einsum("bhqk,bhkd->bhqd", attn, v)
    ctx = ctx.transpose(0, 2, 1, 3).reshape(B, T, C)
    return ctx @ params["wo"] + params["bo"]


if __name__ == "__main__":
    B, T, C, H = 2, 8, 32, 4

    key = jax.random.PRNGKey(0)
    kx, kp = jax.random.split(key)
    x = jax.random.normal(kx, (B, T, C), jnp.float32)
    params = _init_params(kp, C)

    out = multi_head_self_attention(x, params, num_heads=H)
    out = jax.block_until_ready(out)

    ref = _reference(x, params, num_heads=H)
    assert out.shape == (B, T, C)
    err = float(jnp.max(jnp.abs(out - ref)))
    # bf16 MXU operands -> looser tolerance than pure f32.
    assert err < 3e-2, f"mismatch vs reference: max abs err {err}"

    print("KERNEL_OK")
</pallas_src>

<mosaic_0001>
module attributes {stable_mosaic.version = 11 : i64} {
  func.func @_qkv_proj_kernel(%arg0: i32, %arg1: i32, %arg2: memref<1x8x32xbf16, #tpu.memory_space<vmem>>, %arg3: memref<32x96xbf16, #tpu.memory_space<vmem>>, %arg4: memref<1x96xf32, #tpu.memory_space<vmem>>, %arg5: memref<1x8x96xbf16, #tpu.memory_space<vmem>>) attributes {dimension_semantics = [#tpu.dimension_semantics<parallel>, #tpu.dimension_semantics<parallel>], iteration_bounds = array<i64: 2, 1>, scalar_prefetch = 0 : i64, scratch_operands = 0 : i64, tpu.core_type = #tpu.core_type<tc>, window_params = [{transform_indices = @transform_0, window_bounds = array<i64: 1, 8, 32>}, {pipeline_mode = #tpu.pipeline_mode<synchronous>, transform_indices = @transform_1, window_bounds = array<i64: 32, 96>}, {pipeline_mode = #tpu.pipeline_mode<synchronous>, transform_indices = @transform_2, window_bounds = array<i64: 1, 96>}, {transform_indices = @transform_3, window_bounds = array<i64: 1, 8, 96>}]} {
    %c0 = arith.constant 0 : index
    %c0_0 = arith.constant 0 : index
    %c0_1 = arith.constant 0 : index
    %0 = vector.load %arg2[%c0, %c0_0, %c0_1] : memref<1x8x32xbf16, #tpu.memory_space<vmem>>, vector<1x8x32xbf16>
    %1 = vector.shape_cast %0 : vector<1x8x32xbf16> to vector<8x32xbf16>
    %c0_2 = arith.constant 0 : index
    %c0_3 = arith.constant 0 : index
    %2 = vector.load %arg3[%c0_2, %c0_3] : memref<32x96xbf16, #tpu.memory_space<vmem>>, vector<32x96xbf16>
    %cst = arith.constant dense<0.000000e+00> : vector<8x96xf32>
    %3 = tpu.matmul %1, %2, %cst {dimension_numbers = #tpu.dot_dimension_numbers<[1], [0], [0], [1], [0, 0, 1, 1], [], []>} : vector<8x32xbf16>, vector<32x96xbf16>, vector<8x96xf32> -> vector<8x96xf32>
    %c0_4 = arith.constant 0 : index
    %c0_5 = arith.constant 0 : index
    %4 = vector.load %arg4[%c0_4, %c0_5] : memref<1x96xf32, #tpu.memory_space<vmem>>, vector<1x96xf32>
    %5 = vector.broadcast %4 : vector<1x96xf32> to vector<8x96xf32>
    %6 = arith.addf %3, %5 : vector<8x96xf32>
    %7 = arith.truncf %6 : vector<8x96xf32> to vector<8x96xbf16>
    %c0_6 = arith.constant 0 : index
    %c0_7 = arith.constant 0 : index
    %c0_8 = arith.constant 0 : index
    %8 = vector.load %arg5[%c0_6, %c0_7, %c0_8] : memref<1x8x96xbf16, #tpu.memory_space<vmem>>, vector<1x8x96xbf16>
    %9 = vector.shape_cast %8 : vector<1x8x96xbf16> to vector<8x96xbf16>
    %10 = vector.shape_cast %7 : vector<8x96xbf16> to vector<1x8x96xbf16>
    tpu.vector_store %arg5[%c0_6, %c0_7, %c0_8], %10 {strides = array<i32>} : memref<1x8x96xbf16, #tpu.memory_space<vmem>>, vector<1x8x96xbf16>,
    return
  }
  func.func @transform_0(%arg0: i32, %arg1: i32) -> (i32, i32, i32) {
    %c0_i32 = arith.constant 0 : i32
    %c0_i32_0 = arith.constant 0 : i32
    return %arg0, %arg1, %c0_i32 : i32, i32, i32
  }
  func.func @transform_1(%arg0: i32, %arg1: i32) -> (i32, i32) {
    %c0_i32 = arith.constant 0 : i32
    %c0_i32_0 = arith.constant 0 : i32
    %c0_i32_1 = arith.constant 0 : i32
    return %c0_i32, %c0_i32_0 : i32, i32
  }
  func.func @transform_2(%arg0: i32, %arg1: i32) -> (i32, i32) {
    %c0_i32 = arith.constant 0 : i32
    %c0_i32_0 = arith.constant 0 : i32
    %c0_i32_1 = arith.constant 0 : i32
    return %c0_i32, %c0_i32_0 : i32, i32
  }
  func.func @transform_3(%arg0: i32, %arg1: i32) -> (i32, i32, i32) {
    %c0_i32 = arith.constant 0 : i32
    %c0_i32_0 = arith.constant 0 : i32
    return %arg0, %arg1, %c0_i32 : i32, i32, i32
  }
}

module attributes {stable_mosaic.version = 11 : i64} {
  func.func @_attn_kernel(%arg0: i32, %arg1: i32, %arg2: i32, %arg3: memref<1x4x8x8xbf16, #tpu.memory_space<vmem>>, %arg4: memref<1x4x8x8xbf16, #tpu.memory_space<vmem>>, %arg5: memref<1x4x8x8xbf16, #tpu.memory_space<vmem>>, %arg6: memref<32x32xbf16, #tpu.memory_space<vmem>>, %arg7: memref<1x32xf32, #tpu.memory_space<vmem>>, %arg8: memref<1x8x32xf32, #tpu.memory_space<vmem>>, %arg9: memref<4x8x1xf32, #tpu.memory_space<vmem>>, %arg10: memref<4x8x1xf32, #tpu.memory_space<vmem>>, %arg11: memref<4x8x8xf32, #tpu.memory_space<vmem>>, %arg12: memref<8x32xbf16, #tpu.memory_space<vmem>>) attributes {dimension_semantics = [#tpu.dimension_semantics<parallel>, #tpu.dimension_semantics<parallel>, #tpu.dimension_semantics<arbitrary>], iteration_bounds = array<i64: 2, 1, 1>, scalar_prefetch = 0 : i64, scratch_operands = 4 : i64, tpu.core_type = #tpu.core_type<tc>, window_params = [{transform_indices = @transform_0, window_bounds = array<i64: 1, 4, 8, 8>}, {transform_indices = @transform_1, window_bounds = array<i64: 1, 4, 8, 8>}, {transform_indices = @transform_2, window_bounds = array<i64: 1, 4, 8, 8>}, {pipeline_mode = #tpu.pipeline_mode<synchronous>, transform_indices = @transform_3, window_bounds = array<i64: 32, 32>}, {pipeline_mode = #tpu.pipeline_mode<synchronous>, transform_indices = @transform_4, window_bounds = array<i64: 1, 32>}, {transform_indices = @transform_5, window_bounds = array<i64: 1, 8, 32>}]} {
    %c0_i32 = arith.constant 0 : i32
    %0 = arith.cmpi eq, %arg2, %c0_i32 : i32
    %1 = arith.extui %0 : i1 to i32
    %c0_i32_0 = arith.constant 0 : i32
    %2 = arith.cmpi ne, %1, %c0_i32_0 : i32
    scf.if %2 {
      %cst_35 = arith.constant 0xFF800000 : f32
      %36 = vector.broadcast %cst_35 : f32 to vector<4x8x1xf32>
      %c0_36 = arith.constant 0 : index
      %c0_37 = arith.constant 0 : index
      %c0_38 = arith.constant 0 : index
      %37 = vector.load %arg9[%c0_36, %c0_37, %c0_38] : memref<4x8x1xf32, #tpu.memory_space<vmem>>, vector<4x8x1xf32>
      tpu.vector_store %arg9[%c0_36, %c0_37, %c0_38], %36 {strides = array<i32>} : memref<4x8x1xf32, #tpu.memory_space<vmem>>, vector<4x8x1xf32>,
      %cst_39 = arith.constant 0.000000e+00 : f32
      %38 = vector.broadcast %cst_39 : f32 to vector<4x8x1xf32>
      %c0_40 = arith.constant 0 : index
      %c0_41 = arith.constant 0 : index
      %c0_42 = arith.constant 0 : index
      %39 = vector.load %arg10[%c0_40, %c0_41, %c0_42] : memref<4x8x1xf32, #tpu.memory_space<vmem>>, vector<4x8x1xf32>
      tpu.vector_store %arg10[%c0_40, %c0_41, %c0_42], %38 {strides = array<i32>} : memref<4x8x1xf32, #tpu.memory_space<vmem>>, vector<4x8x1xf32>,
      %cst_43 = arith.constant 0.000000e+00 : f32
      %40 = vector.broadcast %cst_43 : f32 to vector<4x8x8xf32>
      %c0_44 = arith.constant 0 : index
      %c0_45 = arith.constant 0 : index
      %c0_46 = arith.constant 0 : index
      %41 = vector.load %arg11[%c0_44, %c0_45, %c0_46] : memref<4x8x8xf32, #tpu.memory_space<vmem>>, vector<4x8x8xf32>
      tpu.vector_store %arg11[%c0_44, %c0_45, %c0_46], %40 {strides = array<i32>} : memref<4x8x8xf32, #tpu.memory_space<vmem>>, vector<4x8x8xf32>,
    } else {
    }
    %c0 = arith.constant 0 : index
    %c0_1 = arith.constant 0 : index
    %c0_2 = arith.constant 0 : index
    %c0_3 = arith.constant 0 : index
    %3 = vector.load %arg3[%c0, %c0_1, %c0_2, %c0_3] : memref<1x4x8x8xbf16, #tpu.memory_space<vmem>>, vector<1x4x8x8xbf16>
    %4 = vector.shape_cast %3 : vector<1x4x8x8xbf16> to vector<4x8x8xbf16>
    %c0_4 = arith.constant 0 : index
    %c0_5 = arith.constant 0 : index
    %c0_6 = arith.constant 0 : index
    %c0_7 = arith.constant 0 : index
    %5 = vector.load %arg4[%c0_4, %c0_5, %c0_6, %c0_7] : memref<1x4x8x8xbf16, #tpu.memory_space<vmem>>, vector<1x4x8x8xbf16>
    %6 = vector.shape_cast %5 : vector<1x4x8x8xbf16> to vector<4x8x8xbf16>
    %c0_8 = arith.constant 0 : index
    %c0_9 = arith.constant 0 : index
    %c0_10 = arith.constant 0 : index
    %c0_11 = arith.constant 0 : index
    %7 = vector.load %arg5[%c0_8, %c0_9, %c0_10, %c0_11] : memref<1x4x8x8xbf16, #tpu.memory_space<vmem>>, vector<1x4x8x8xbf16>
    %8 = vector.shape_cast %7 : vector<1x4x8x8xbf16> to vector<4x8x8xbf16>
    "tpu.trace_start"() <{level = 10 : i32, message = "hqd,hkd->hqk"}> : () -> ()
    %cst = arith.constant dense<0.000000e+00> : vector<4x8x8xf32>
    %9 = tpu.matmul %4, %6, %cst {dimension_numbers = #tpu.dot_dimension_numbers<[2], [2], [1], [1], [0, 0, 0, 1, 1, 1], [0], [0]>} : vector<4x8x8xbf16>, vector<4x8x8xbf16>, vector<4x8x8xf32> -> vector<4x8x8xf32>
    "tpu.trace_stop"() : () -> ()
    %c0_12 = arith.constant 0 : index
    %c0_13 = arith.constant 0 : index
    %c0_14 = arith.constant 0 : index
    %10 = vector.load %arg9[%c0_12, %c0_13, %c0_14] : memref<4x8x1xf32, #tpu.memory_space<vmem>>, vector<4x8x1xf32>
    %cst_15 = arith.constant dense<0xFF800000> : vector<4x8xf32>
    %11 = vector.multi_reduction <maximumf>, %9, %cst_15 [2] : vector<4x8x8xf32> to vector<4x8xf32>
    %12 = vector.shape_cast %11 : vector<4x8xf32> to vector<4x8x1xf32>
    %13 = arith.maximumf %10, %12 : vector<4x8x1xf32>
    %14 = arith.subf %10, %13 : vector<4x8x1xf32>
    %15 = math.exp %14 : vector<4x8x1xf32>
    %16 = vector.broadcast %13 : vector<4x8x1xf32> to vector<4x8x8xf32>
    %17 = arith.subf %9, %16 : vector<4x8x8xf32>
    %18 = math.exp %17 : vector<4x8x8xf32>
    %c0_16 = arith.constant 0 : index
    %c0_17 = arith.constant 0 : index
    %c0_18 = arith.constant 0 : index
    %19 = vector.load %arg10[%c0_16, %c0_17, %c0_18] : memref<4x8x1xf32, #tpu.memory_space<vmem>>, vector<4x8x1xf32>
    %20 = arith.mulf %15, %19 : vector<4x8x1xf32>
    %cst_19 = arith.constant dense<0.000000e+00> : vector<4x8xf32>
    %21 = vector.multi_reduction <add>, %18, %cst_19 [2] : vector<4x8x8xf32> to vector<4x8xf32>
    %22 = vector.shape_cast %21 : vector<4x8xf32> to vector<4x8x1xf32>
    %23 = arith.addf %20, %22 : vector<4x8x1xf32>
    %c0_20 = arith.constant 0 : index
    %c0_21 = arith.constant 0 : index
    %c0_22 = arith.constant 0 : index
    %24 = vector.load %arg10[%c0_20, %c0_21, %c0_22] : memref<4x8x1xf32, #tpu.memory_space<vmem>>, vector<4x8x1xf32>
    tpu.vector_store %arg10[%c0_20, %c0_21, %c0_22], %23 {strides = array<i32>} : memref<4x8x1xf32, #tpu.memory_space<vmem>>, vector<4x8x1xf32>,
    %c0_23 = arith.constant 0 : index
    %c0_24 = arith.constant 0 : index
    %c0_25 = arith.constant 0 : index
    %25 = vector.load %arg11[%c0_23, %c0_24, %c0_25] : memref<4x8x8xf32, #tpu.memory_space<vmem>>, vector<4x8x8xf32>
    %26 = vector.broadcast %15 : vector<4x8x1xf32> to vector<4x8x8xf32>
    %27 = arith.mulf %26, %25 : vector<4x8x8xf32>
    %28 = arith.truncf %18 : vector<4x8x8xf32> to vector<4x8x8xbf16>
    "tpu.trace_start"() <{level = 10 : i32, message = "hqk,hkd->hqd"}> : () -> ()
    %cst_26 = arith.constant dense<0.000000e+00> : vector<4x8x8xf32>
    %29 = tpu.matmul %28, %8, %cst_26 {dimension_numbers = #tpu.dot_dimension_numbers<[2], [1], [1], [2], [0, 0, 0, 1, 1, 2], [0], [0]>} : vector<4x8x8xbf16>, vector<4x8x8xbf16>, vector<4x8x8xf32> -> vector<4x8x8xf32>
    "tpu.trace_stop"() : () -> ()
    %30 = arith.addf %27, %29 : vector<4x8x8xf32>
    %c0_27 = arith.constant 0 : index
    %c0_28 = arith.constant 0 : index
    %c0_29 = arith.constant 0 : index
    %31 = vector.load %arg11[%c0_27, %c0_28, %c0_29] : memref<4x8x8xf32, #tpu.memory_space<vmem>>, vector<4x8x8xf32>
    tpu.vector_store %arg11[%c0_27, %c0_28, %c0_29], %30 {strides = array<i32>} : memref<4x8x8xf32, #tpu.memory_space<vmem>>, vector<4x8x8xf32>,
    %c0_30 = arith.constant 0 : index
    %c0_31 = arith.constant 0 : index
    %c0_32 = arith.constant 0 : index
    %32 = vector.load %arg9[%c0_30, %c0_31, %c0_32] : memref<4x8x1xf32, #tpu.memory_space<vmem>>, vector<4x8x1xf32>
    tpu.vector_store %arg9[%c0_30, %c0_31, %c0_32], %13 {strides = array<i32>} : memref<4x8x1xf32, #tpu.memory_space<vmem>>, vector<4x8x1xf32>,
    %c0_i32_33 = arith.constant 0 : i32
    %33 = arith.cmpi eq, %arg2, %c0_i32_33 : i32
    %34 = arith.extui %33 : i1 to i32
    %c0_i32_34 = arith.constant 0 : i32
    %35 = arith.cmpi ne, %34, %c0_i32_34 : i32
    scf.if %35 {
      %c0_35 = arith.constant 0 : index
      %c0_36 = arith.constant 0 : index
      %c0_37 = arith.constant 0 : index
      %36 = vector.load %arg11[%c0_35, %c0_36, %c0_37] : memref<4x8x8xf32, #tpu.memory_space<vmem>>, vector<4x8x8xf32>
      %c0_38 = arith.constant 0 : index
      %c0_39 = arith.constant 0 : index
      %c0_40 = arith.constant 0 : index
      %37 = vector.load %arg10[%c0_38, %c0_39, %c0_40] : memref<4x8x1xf32, #tpu.memory_space<vmem>>, vector<4x8x1xf32>
      %38 = vector.broadcast %37 : vector<4x8x1xf32> to vector<4x8x8xf32>
      %39 = arith.divf %36, %38 : vector<4x8x8xf32>
      %40 = arith.truncf %39 : vector<4x8x8xf32> to vector<4x8x8xbf16>
      %41 = vector.extract_strided_slice %40 {offsets = [0, 0, 0], sizes = [1, 8, 8], strides = [1, 1, 1]} : vector<4x8x8xbf16> to vector<1x8x8xbf16>
      %42 = vector.shape_cast %41 : vector<1x8x8xbf16> to vector<8x8xbf16>
      %c0_41 = arith.constant 0 : index
      %c0_42 = arith.constant 0 : index
      %43 = vector.load %arg12[%c0_41, %c0_42] : memref<8x32xbf16, #tpu.memory_space<vmem>>, vector<8x8xbf16>
      tpu.vector_store %arg12[%c0_41, %c0_42], %42 {strides = array<i32>} : memref<8x32xbf16, #tpu.memory_space<vmem>>, vector<8x8xbf16>,
      %44 = vector.extract_strided_slice %40 {offsets = [1, 0, 0], sizes = [1, 8, 8], strides = [1, 1, 1]} : vector<4x8x8xbf16> to vector<1x8x8xbf16>
      %45 = vector.shape_cast %44 : vector<1x8x8xbf16> to vector<8x8xbf16>
      %c0_43 = arith.constant 0 : index
      %c8 = arith.constant 8 : index
      %46 = vector.load %arg12[%c0_43, %c8] : memref<8x32xbf16, #tpu.memory_space<vmem>>, vector<8x8xbf16>
      tpu.vector_store %arg12[%c0_43, %c8], %45 {strides = array<i32>} : memref<8x32xbf16, #tpu.memory_space<vmem>>, vector<8x8xbf16>,
      %47 = vector.extract_strided_slice %40 {offsets = [2, 0, 0], sizes = [1, 8, 8], strides = [1, 1, 1]} : vector<4x8x8xbf16> to vector<1x8x8xbf16>
      %48 = vector.shape_cast %47 : vector<1x8x8xbf16> to vector<8x8xbf16>
      %c0_44 = arith.constant 0 : index
      %c16 = arith.constant 16 : index
      %49 = vector.load %arg12[%c0_44, %c16] : memref<8x32xbf16, #tpu.memory_space<vmem>>, vector<8x8xbf16>
      tpu.vector_store %arg12[%c0_44, %c16], %48 {strides = array<i32>} : memref<8x32xbf16, #tpu.memory_space<vmem>>, vector<8x8xbf16>,
      %50 = vector.extract_strided_slice %40 {offsets = [3, 0, 0], sizes = [1, 8, 8], strides = [1, 1, 1]} : vector<4x8x8xbf16> to vector<1x8x8xbf16>
      %51 = vector.shape_cast %50 : vector<1x8x8xbf16> to vector<8x8xbf16>
      %c0_45 = arith.constant 0 : index
      %c24 = arith.constant 24 : index
      %52 = vector.load %arg12[%c0_45, %c24] : memref<8x32xbf16, #tpu.memory_space<vmem>>, vector<8x8xbf16>
      tpu.vector_store %arg12[%c0_45, %c24], %51 {strides = array<i32>} : memref<8x32xbf16, #tpu.memory_space<vmem>>, vector<8x8xbf16>,
      %c0_46 = arith.constant 0 : index
      %c0_47 = arith.constant 0 : index
      %53 = vector.load %arg12[%c0_46, %c0_47] : memref<8x32xbf16, #tpu.memory_space<vmem>>, vector<8x32xbf16>
      %c0_48 = arith.constant 0 : index
      %c0_49 = arith.constant 0 : index
      %54 = vector.load %arg6[%c0_48, %c0_49] : memref<32x32xbf16, #tpu.memory_space<vmem>>, vector<32x32xbf16>
      %cst_50 = arith.constant dense<0.000000e+00> : vector<8x32xf32>
      %55 = tpu.matmul %53, %54, %cst_50 {dimension_numbers = #tpu.dot_dimension_numbers<[1], [0], [0], [1], [0, 0, 1, 1], [], []>} : vector<8x32xbf16>, vector<32x32xbf16>, vector<8x32xf32> -> vector<8x32xf32>
      %c0_51 = arith.constant 0 : index
      %c0_52 = arith.constant 0 : index
      %56 = vector.load %arg7[%c0_51, %c0_52] : memref<1x32xf32, #tpu.memory_space<vmem>>, vector<1x32xf32>
      %57 = vector.broadcast %56 : vector<1x32xf32> to vector<8x32xf32>
      %58 = arith.addf %55, %57 : vector<8x32xf32>
      %c0_53 = arith.constant 0 : index
      %c0_54 = arith.constant 0 : index
      %c0_55 = arith.constant 0 : index
      %59 = vector.load %arg8[%c0_53, %c0_54, %c0_55] : memref<1x8x32xf32, #tpu.memory_space<vmem>>, vector<1x8x32xf32>
      %60 = vector.shape_cast %59 : vector<1x8x32xf32> to vector<8x32xf32>
      %61 = vector.shape_cast %58 : vector<8x32xf32> to vector<1x8x32xf32>
      tpu.vector_store %arg8[%c0_53, %c0_54, %c0_55], %61 {strides = array<i32>} : memref<1x8x32xf32, #tpu.memory_space<vmem>>, vector<1x8x32xf32>,
    } else {
    }
    return
  }
  func.func @transform_0(%arg0: i32, %arg1: i32, %arg2: i32) -> (i32, i32, i32, i32) {
    %c0_i32 = arith.constant 0 : i32
    %c0_i32_0 = arith.constant 0 : i32
    %c0_i32_1 = arith.constant 0 : i32
    return %arg0, %c0_i32, %arg1, %c0_i32_0 : i32, i32, i32, i32
  }
  func.func @transform_1(%arg0: i32, %arg1: i32, %arg2: i32) -> (i32, i32, i32, i32) {
    %c0_i32 = arith.constant 0 : i32
    %c0_i32_0 = arith.constant 0 : i32
    %c0_i32_1 = arith.constant 0 : i32
    return %arg0, %c0_i32, %arg2, %c0_i32_0 : i32, i32, i32, i32
  }
  func.func @transform_2(%arg0: i32, %arg1: i32, %arg2: i32) -> (i32, i32, i32, i32) {
    %c0_i32 = arith.constant 0 : i32
    %c0_i32_0 = arith.constant 0 : i32
    %c0_i32_1 = arith.constant 0 : i32
    return %arg0, %c0_i32, %arg2, %c0_i32_0 : i32, i32, i32, i32
  }
  func.func @transform_3(%arg0: i32, %arg1: i32, %arg2: i32) -> (i32, i32) {
    %c0_i32 = arith.constant 0 : i32
    %c0_i32_0 = arith.constant 0 : i32
    %c0_i32_1 = arith.constant 0 : i32
    return %c0_i32, %c0_i32_0 : i32, i32
  }
  func.func @transform_4(%arg0: i32, %arg1: i32, %arg2: i32) -> (i32, i32) {
    %c0_i32 = arith.constant 0 : i32
    %c0_i32_0 = arith.constant 0 : i32
    %c0_i32_1 = arith.constant 0 : i32
    return %c0_i32, %c0_i32_0 : i32, i32
  }
  func.func @transform_5(%arg0: i32, %arg1: i32, %arg2: i32) -> (i32, i32, i32) {
    %c0_i32 = arith.constant 0 : i32
    %c0_i32_0 = arith.constant 0 : i32
    return %arg0, %arg1, %c0_i32 : i32, i32, i32
  }
}

</mosaic_0001>

<llo_original>
// kernel: multi_head_self_attention.2
$region0: #{multi_head_self_attention.2}
  #allocation0 [shape = 'u32[]', space=smem, size = 0x4, offset = 0x4, fixed_abs, tag = 'smem constant byte address 0x4 - core index']
  #allocation1 [shape = 'u32[144,128]{1,0:T(1,128)}', space=vmem, size = 0x12000, scoped, tag = 'internal scratch']
  %s0 = inlined_call_operand.vmem [shape: bf16[2,8,32], index: 0, kind: input, shape index: {}]
  %s1 = inlined_call_operand.vmem [shape: bf16[32,96], index: 1, kind: input, shape index: {}]
  %s2 = inlined_call_operand.vmem [shape: f32[1,96], index: 2, kind: input, shape index: {}]
  %s3 = inlined_call_operand.vmem [shape: bf16[2,8,96], index: 3, kind: output, shape index: {}]
  %s4 = sld [smem:[#allocation0]]
  $region45: #{multi_head_self_attention.2} parent=0
    _
  %s6 = ssub.s32 1, %s4
  %s7 = scalar_select 0, %s6, %s4
  loop: start=0, step=1, limit=4
  $region2: #{multi_head_self_attention.2} parent=0 // loop_pre_header
    _
  $region3: #{multi_head_self_attention.2} parent=0 // loop_header
    %s9 = sphi 0, %s13
    %p10 = scmp.ge.s32.totalorder %s9, 4
    %s16 = sphi 0, %s28
    %s17 = sphi 0, %s24
    %s18 = sphi 0, %s16
    %s19 = sphi 0, %s17
    %s20 = sphi 0, %s18
    %s21 = sphi 0, %s19
    %s33 = sphi 0, %s35
    %s36 = sphi 0, %s33
    %s37 = sphi 0, %s36
    %s53 = sphi 0, %s37
    %s57 = sphi 0, %s57
    %s59 = sphi 0, %s57
    %s60 = sphi 0, %s59
    %s74 = sphi 0, %s60
    %s78 = sphi 0, %s78
    %s80 = sphi 0, %s78
    %s81 = sphi 0, %s80
    %s95 = sphi 0, %s81
    %s103 = sphi 0, %s105
    %s106 = sphi 0, %s103
    %s107 = sphi 0, %s106
    %s123 = sphi 0, %s107
  $region4: #{multi_head_self_attention.2} parent=0 // loop_header_branch
    %12 = sbr.rel (%p10) target = $region8
  $region5: #{multi_head_self_attention.2} parent=0 // loop_body
    %s14 = ssub.s32 %s9, 1
    %s15 = ssub.s32 %s9, 2
    %s22 = sadd.s32 1, %s17
    %p23 = scmp.ge.s32.totalorder %s22, 1
    %s24 = scalar_select %p23, 0, %s22
    %s25 = sadd.s32 1, %s16
    %s26 = scalar_select %p23, %s25, %s16
    %p27 = scmp.ge.s32.totalorder %s26, 2
    %s28 = scalar_select %p27, 0, %s26
    %s29 = ssub.s32 %s16, %s28
    %s30 = ssub.s32 %s17, %s24
    %s31 = sor.u32 %s29, %s30
    %p32 = scmp.eq.s32.totalorder %s31, 0
    %s34 = sadd.s32 %s33, 1
    %s35 = scalar_select %p32, %s33, %s34
    %p38 = pneg %p32
    %p39 = scmp.eq.s32.totalorder %s9, 1
    %p40 = por %p38, %p39
    %p41 = scmp.ne.s32.totalorder %s33, %s36
    %p42 = scmp.eq.s32.totalorder %s9, 0
    %p43 = por %p41, %p42
    %p44 = scmp.ne.s32.totalorder %s33, %s36
    %p45 = scmp.eq.s32.totalorder %s14, 1
    %p46 = por %p44, %p45
    %p47 = scmp.ne.s32.totalorder %s36, %s37
    %p48 = scmp.eq.s32.totalorder %s14, 0
    %p49 = por %p47, %p48
    %p50 = scmp.ne.s32.totalorder %s36, %s37
    %p51 = scmp.eq.s32.totalorder %s15, 1
    %p52 = por %p50, %p51
    %p54 = scmp.ne.s32.totalorder %s37, %s53
    %p55 = scmp.eq.s32.totalorder %s15, 0
    %p56 = por %p54, %p55
    %s58 = sadd.s32 %s57, 1
    %p61 = scmp.eq.s32.totalorder %s9, 1
    %p62 = scmp.ne.s32.totalorder %s57, %s59
    %p63 = scmp.eq.s32.totalorder %s9, 0
    %p64 = por %p62, %p63
    %p65 = scmp.ne.s32.totalorder %s57, %s59
    %p66 = scmp.eq.s32.totalorder %s14, 1
    %p67 = por %p65, %p66
    %p68 = scmp.ne.s32.totalorder %s59, %s60
    %p69 = scmp.eq.s32.totalorder %s14, 0
    %p70 = por %p68, %p69
    %p71 = scmp.ne.s32.totalorder %s59, %s60
    %p72 = scmp.eq.s32.totalorder %s15, 1
    %p73 = por %p71, %p72
    %p75 = scmp.ne.s32.totalorder %s60, %s74
    %p76 = scmp.eq.s32.totalorder %s15, 0
    %p77 = por %p75, %p76
    %s79 = sadd.s32 %s78, 1
    %p82 = scmp.eq.s32.totalorder %s9, 1
    %p83 = scmp.ne.s32.totalorder %s78, %s80
    %p84 = scmp.eq.s32.totalorder %s9, 0
    %p85 = por %p83, %p84
    %p86 = scmp.ne.s32.totalorder %s78, %s80
    %p87 = scmp.eq.s32.totalorder %s14, 1
    %p88 = por %p86, %p87
    %p89 = scmp.ne.s32.totalorder %s80, %s81
    %p90 = scmp.eq.s32.totalorder %s14, 0
    %p91 = por %p89, %p90
    %p92 = scmp.ne.s32.totalorder %s80, %s81
    %p93 = scmp.eq.s32.totalorder %s15, 1
    %p94 = por %p92, %p93
    %p96 = scmp.ne.s32.totalorder %s81, %s95
    %p97 = scmp.eq.s32.totalorder %s15, 0
    %p98 = por %p96, %p97
    %s99 = ssub.s32 %s16, %s28
    %s100 = ssub.s32 %s17, %s24
    %s101 = sor.u32 %s99, %s100
    %p102 = scmp.eq.s32.totalorder %s101, 0
    %s104 = sadd.s32 %s103, 1
    %s105 = scalar_select %p102, %s103, %s104
    %p108 = pneg %p102
    %p109 = scmp.eq.s32.totalorder %s9, 1
    %p110 = por %p108, %p109
    %p111 = scmp.ne.s32.totalorder %s103, %s106
    %p112 = scmp.eq.s32.totalorder %s9, 0
    %p113 = por %p111, %p112
    %p114 = scmp.ne.s32.totalorder %s103, %s106
    %p115 = scmp.eq.s32.totalorder %s14, 1
    %p116 = por %p114, %p115
    %p117 = scmp.ne.s32.totalorder %s106, %s107
    %p118 = scmp.eq.s32.totalorder %s14, 0
    %p119 = por %p117, %p118
    %p120 = scmp.ne.s32.totalorder %s106, %s107
    %p121 = scmp.eq.s32.totalorder %s15, 1
    %p122 = por %p120, %p121
    %p124 = scmp.ne.s32.totalorder %s107, %s123
    %p125 = scmp.eq.s32.totalorder %s15, 0
    %p126 = por %p124, %p125
    %p127 = scmp.le.s32.totalorder 1, %s9
    %p128 = scmp.lt.s32.totalorder %s9, 3
    %p129 = pnand %p127, %p128
    %p130 = pneg %p129
    // Predicated region
    $region9: #{multi_head_self_attention.2} parent=5 // pred_check
      _
    $region10: #{multi_head_self_attention.2} parent=5 // pred_check_branch
      %132 = sbr.rel (%p129) target = $region12
    $region11: #{multi_head_self_attention.2} parent=5 // pred_region
      %s133 = ssub.s32 %s9, 1
      // Predicated region
      $region13: #{multi_head_self_attention.2} parent=11 // pred_check
        %p134 = pneg %p70
      $region14: #{multi_head_self_attention.2} parent=11 // pred_check_branch
        %136 = sbr.rel (%p134) target = $region16
      $region15: #{multi_head_self_attention.2} parent=11 // pred_region
        _
      $region16: #{multi_head_self_attention.2} parent=11 // pred_fallthru
        _
      // Predicated region
      $region17: #{multi_head_self_attention.2} parent=11 // pred_check
        %p137 = pneg %p91
      $region18: #{multi_head_self_attention.2} parent=11 // pred_check_branch
        %139 = sbr.rel (%p137) target = $region20
      $region19: #{multi_head_self_attention.2} parent=11 // pred_region
        _
      $region20: #{multi_head_self_attention.2} parent=11 // pred_fallthru
        _
    $region12: #{multi_head_self_attention.2} parent=5 // pred_fallthru
      _
    %p140 = scmp.lt.s32.totalorder %s9, 2
    // Predicated region
    $region21: #{multi_head_self_attention.2} parent=5 // pred_check
      %p141 = pneg %p140
    $region22: #{multi_head_self_attention.2} parent=5 // pred_check_branch
      %143 = sbr.rel (%p141) target = $region24
    $region23: #{multi_head_self_attention.2} parent=5 // pred_region
      // Predicated region
      $region25: #{multi_head_self_attention.2} parent=23 // pred_check
        %p144 = pneg %p43
      $region26: #{multi_head_self_attention.2} parent=23 // pred_check_branch
        %146 = sbr.rel (%p144) target = $region28
      $region27: #{multi_head_self_attention.2} parent=23 // pred_region
        %p147 = scmp.lt.s32.totalorder %s16, 1
        %s148 = scalar_select %p147, %s16, 1
        %p149 = scmp.lt.s32.totalorder %s17, 0
        %s150 = scalar_select %p149, %s17, 0
        %s151 = sadd.s32 %s150, %s148
        %s152 = smul.addr %s151, 4
        %s153 = scalar_lea.vmem %s0, %s152
      $region28: #{multi_head_self_attention.2} parent=23 // pred_fallthru
        _
    $region24: #{multi_head_self_attention.2} parent=5 // pred_fallthru
      _
    %p154 = scmp.le.s32.totalorder 1, %s9
    %p155 = scmp.lt.s32.totalorder %s9, 3
    %p156 = pnand %p154, %p155
    %p157 = pneg %p156
    // Predicated region
    $region29: #{multi_head_self_attention.2} parent=5 // pred_check
      _
    $region30: #{multi_head_self_attention.2} parent=5 // pred_check_branch
      %159 = sbr.rel (%p156) target = $region32
    $region31: #{multi_head_self_attention.2} parent=5 // pred_region
      %s160 = ssub.s32 %s9, 1
      %p161 = scmp.lt.s32.totalorder %s18, 1
      %s162 = scalar_select %p161, %s18, 1
      %p163 = scmp.lt.s32.totalorder %s19, 0
      %s164 = scalar_select %p163, %s19, 0
      %s165 = sadd.s32 %s164, %s162
      %s166 = smul.addr %s165, 4
      %s167 = scalar_lea.vmem %s0, %s166
      %p168 = pneg %p49
      %p169 = pneg %p46
      %p170 = pneg %p70
      %p171 = pneg %p67
      %p172 = pneg %p91
      %p173 = pneg %p88
      %p174 = pneg %p119
      %p175 = pneg %p116
      %p176 = scmp.lt.s32.totalorder %s18, 1
      %s177 = scalar_select %p176, %s18, 1
      %p178 = scmp.lt.s32.totalorder %s19, 0
      %s179 = scalar_select %p178, %s19, 0
      %s180 = sadd.s32 %s179, %s177
      %s181 = smul.addr %s180, 4
      %s182 = scalar_lea.vmem %s3, %s181
      %p183 = scmp.lt.s32.totalorder %s18, 1
      %s184 = scalar_select %p183, %s18, 1
      %p185 = scmp.lt.s32.totalorder %s19, 0
      %s186 = scalar_select %p185, %s19, 0
      %s187 = sadd.s32 %s186, %s184
      %s188 = smul.addr %s187, 4
      %s189 = scalar_lea.vmem %s0, %s188
      %p190 = scmp.lt.s32.totalorder %s18, 1
      %s191 = scalar_select %p190, %s18, 1
      %p192 = scmp.lt.s32.totalorder %s19, 0
      %s193 = scalar_select %p192, %s19, 0
      %s194 = sadd.s32 %s193, %s191
      %s195 = smul.addr %s194, 4
      %s196 = scalar_lea.vmem %s3, %s195
      %v198 = vld [vmem:[%s189] sm:$0xf]
      %v199 = vld [vmem:[%s1] sm:$0xf]
      %v200 = vld [vmem:[%s1 + $0x4] sm:$0xf]
      %v201 = vld [vmem:[%s1 + $0x8] sm:$0xf]
      %v202 = vld [vmem:[%s1 + $0xc] sm:$0xf]
      %v203 = vld [vmem:[%s2] sm:$0x1]
      %v205 = vlaneseq
      %v206 = vshrl.u32 %v205, 7
      %v207 = vsub.s32 0, %v206
      %v208 = vrot.slane %v203, %v207
      %v214 = vunpack.c.l.b16 %v199
      %v215 = vunpack.c.l.b16 %v200
      %v216 = vunpack.c.l.b16 %v201
      %v217 = vunpack.c.l.b16 %v202
      %v218 = vpack.c.b16 %v215, %v214
      %v219 = vpack.c.b16 %v217, %v216
      %vm222 = vcmask 261120
      %v224 = vsel %vm222, %v198, 0
      %226 = vmatprep.subr.bf16.mxu0 0
      %227 = vmatpush1.bf16.msra.mxu0 %v218
      %228 = vmatprep.subr.bf16.mxu0 0
      %229 = vmatpush1.bf16.msra.mxu0 %v219
      %230 = vmatprep.subr.bf16.mxu0 0
      %231 = vmatpush1.bf16.msra.mxu0 0
      %232 = vmatprep.subr.bf16.mxu0 0
      %233 = vmatpush1.bf16.msra.mxu0 0
      %234 = vmatprep.subr.bf16.mxu0 0
      %235 = vmatpush1.bf16.msra.mxu0 0
      %236 = vmatprep.subr.bf16.mxu0 0
      %237 = vmatpush1.bf16.msra.mxu0 0
      %238 = vmatprep.subr.bf16.mxu0 0
      %239 = vmatpush1.bf16.msra.mxu0 0
      %240 = vmatprep.subr.bf16.mxu0 0
      %241 = vmatpush1.bf16.msra.mxu0 0
      %242 = vmatprep.subr.bf16.mxu0 0
      %243 = vmatpush1.bf16.msra.mxu0 0
      %244 = vmatprep.subr.bf16.mxu0 0
      %245 = vmatpush1.bf16.msra.mxu0 0
      %246 = vmatprep.subr.bf16.mxu0 0
      %247 = vmatpush1.bf16.msra.mxu0 0
      %248 = vmatprep.subr.bf16.mxu0 0
      %249 = vmatpush1.bf16.msra.mxu0 0
      %250 = vmatprep.subr.bf16.mxu0 0
      %251 = vmatpush1.bf16.msra.mxu0 0
      %252 = vmatprep.subr.bf16.mxu0 0
      %253 = vmatpush1.bf16.msra.mxu0 0
      %254 = vmatprep.subr.bf16.mxu0 0
      %255 = vmatpush1.bf16.msra.mxu0 0
      %256 = vmatprep.subr.bf16.mxu0 0
      %257 = vmatpush1.bf16.msra.mxu0 0
      %258 = vmatprep.mubr.bf16.mxu0 0
      %259 = vmatmul.mubr.bf16.gmra.mrb[0].mxu0 %v224
      %v260 = vpop.f32.mrb[0].mxu0
      %v261 = vadd.f32 %v208, %v260
      %v262 = vpop.f32.mrb[0].mxu0
      %v263 = vpop.f32.mrb[0].mxu0
      %v264 = vpop.f32.mrb[0].mxu0
      %265 = vdwg.mxu0
      %v266 = vpack.c.bf16 %v261, %v261
      %vm267 = vcmask 781312
      %268 = vst.msk [vmem:[%s196] sm:$0xf] %vm267, %v266
      %p269 = scmp.lt.s32.totalorder %s18, 1
      %s270 = scalar_select %p269, %s18, 1
      %p271 = scmp.lt.s32.totalorder %s19, 0
      %s272 = scalar_select %p271, %s19, 0
      %s273 = sadd.s32 %s272, %s270
      %s274 = smul.addr %s273, 4
      %s275 = scalar_lea.vmem %s3, %s274
      // Predicated region
      $region33: #{multi_head_self_attention.2} parent=31 // pred_check
        %p276 = pneg %p116
      $region34: #{multi_head_self_attention.2} parent=31 // pred_check_branch
        %278 = sbr.rel (%p276) target = $region36
      $region35: #{multi_head_self_attention.2} parent=31 // pred_region
        _
      $region36: #{multi_head_self_attention.2} parent=31 // pred_fallthru
        _
    $region32: #{multi_head_self_attention.2} parent=5 // pred_fallthru
      _
    %p279 = scmp.le.s32.totalorder 2, %s9
    // Predicated region
    $region37: #{multi_head_self_attention.2} parent=5 // pred_check
      %p280 = pneg %p279
    $region38: #{multi_head_self_attention.2} parent=5 // pred_check_branch
      %282 = sbr.rel (%p280) target = $region40
    $region39: #{multi_head_self_attention.2} parent=5 // pred_region
      %s283 = ssub.s32 %s9, 2
      // Predicated region
      $region41: #{multi_head_self_attention.2} parent=39 // pred_check
        %p284 = pneg %p122
      $region42: #{multi_head_self_attention.2} parent=39 // pred_check_branch
        %286 = sbr.rel (%p284) target = $region44
      $region43: #{multi_head_self_attention.2} parent=39 // pred_region
        %p287 = scmp.lt.s32.totalorder %s20, 1
        %s288 = scalar_select %p287, %s20, 1
        %p289 = scmp.lt.s32.totalorder %s21, 0
        %s290 = scalar_select %p289, %s21, 0
        %s291 = sadd.s32 %s290, %s288
        %s292 = smul.addr %s291, 4
        %s293 = scalar_lea.vmem %s3, %s292
      $region44: #{multi_head_self_attention.2} parent=39 // pred_fallthru
        _
    $region40: #{multi_head_self_attention.2} parent=5 // pred_fallthru
      _
  $region6: #{multi_head_self_attention.2} parent=0 // loop_footer
    %s13 = sadd.s32 1, %s9
  $region7: #{multi_head_self_attention.2} parent=0 // loop_footer_branch
    %8 = sbr.rel target = $region3
  $region8: #{multi_head_self_attention.2} parent=0 // loop_exit
    _

// kernel: multi_head_self_attention.3
$region0: #{multi_head_self_attention.3}
  #allocation0 [shape = 'u32[]', space=smem, size = 0x4, offset = 0x4, fixed_abs, tag = 'smem constant byte address 0x4 - core index']
  #allocation1 [shape = 'u32[144,128]{1,0:T(1,128)}', space=vmem, size = 0x12000, scoped, tag = 'internal scratch']
  #allocation2 [shape = 'f32[4,8,1]{2,1,0:T(8,128)}', space=vmem, size = 0x4000, scoped, tag = 'scratch operand']
  #allocation3 [shape = 'f32[4,8,1]{2,1,0:T(8,128)}', space=vmem, size = 0x4000, scoped, tag = 'scratch operand']
  #allocation4 [shape = 'f32[4,8,8]{2,1,0:T(8,128)}', space=vmem, size = 0x4000, scoped, tag = 'scratch operand']
  #allocation5 [shape = 'bf16[8,32]{1,0:T(8,128)(2,1)}', space=vmem, size = 0x800, scoped, tag = 'scratch operand']
  %s0 = inlined_call_operand.vmem [shape: bf16[2,4,8,8], index: 0, kind: input, shape index: {}]
  %s1 = inlined_call_operand.vmem [shape: bf16[2,4,8,8], index: 1, kind: input, shape index: {}]
  %s2 = inlined_call_operand.vmem [shape: bf16[2,4,8,8], index: 2, kind: input, shape index: {}]
  %s3 = inlined_call_operand.vmem [shape: bf16[32,32], index: 3, kind: input, shape index: {}]
  %s4 = inlined_call_operand.vmem [shape: f32[1,32], index: 4, kind: input, shape index: {}]
  %s5 = inlined_call_operand.hbm [shape: f32[2,8,32], index: 5, kind: output, shape index: {}]
  %s6 = sld [smem:[#allocation0]]
  $region61: #{multi_head_self_attention.3} parent=0
    _
  %s8 = ssub.s32 1, %s6
  %s9 = scalar_select 0, %s8, %s6
  $region1: #{multi_head_self_attention.3} parent=0
    #allocation6 [shape = 'u8[8192]{0}', space=vmem, size = 0x2000, scoped, tag = 'output window, operand 0']
    #allocation7 [shape = 's32[2]{0}', space=sflag, size = 0x8, scoped, tag = 'scoped memory for multi_head_self_attention.3']
    %10 = vsyncpa [#allocation7], 0
    %s11 = scalar_lea.sflag [#allocation7], 1
    %12 = vsyncpa %s11, 0
    loop: start=0, step=1, limit=4
    $region2: #{multi_head_self_attention.3} parent=1 // loop_pre_header
      _
    $region3: #{multi_head_self_attention.3} parent=1 // loop_header
      %s14 = sphi 0, %s18
      %p15 = scmp.ge.s32.totalorder %s14, 4
      %s21 = sphi 0, %s40
      %s22 = sphi 0, %s36
      %s23 = sphi 0, %s32
      %s24 = sphi 0, %s21
      %s25 = sphi 0, %s22
      %s26 = sphi 0, %s23
      %s27 = sphi 0, %s24
      %s28 = sphi 0, %s25
      %s29 = sphi 0, %s26
      %s45 = sphi 0, %s47
      %s48 = sphi 0, %s45
      %s49 = sphi 0, %s48
      %s65 = sphi 0, %s49
      %s73 = sphi 0, %s75
      %s76 = sphi 0, %s73
      %s77 = sphi 0, %s76
      %s93 = sphi 0, %s77
      %s101 = sphi 0, %s103
      %s104 = sphi 0, %s101
      %s105 = sphi 0, %s104
      %s121 = sphi 0, %s105
      %s125 = sphi 0, %s125
      %s127 = sphi 0, %s125
      %s128 = sphi 0, %s127
      %s142 = sphi 0, %s128
      %s146 = sphi 0, %s146
      %s148 = sphi 0, %s146
      %s149 = sphi 0, %s148
      %s163 = sphi 0, %s149
      %s171 = sphi 0, %s173
      %s174 = sphi 0, %s171
      %s175 = sphi 0, %s174
      %s191 = sphi 0, %s175
    $region4: #{multi_head_self_attention.3} parent=1 // loop_header_branch
      %17 = sbr.rel (%p15) target = $region8
    $region5: #{multi_head_self_attention.3} parent=1 // loop_body
      %s19 = ssub.s32 %s14, 1
      %s20 = ssub.s32 %s14, 2
      %s30 = sadd.s32 1, %s23
      %p31 = scmp.ge.s32.totalorder %s30, 1
      %s32 = scalar_select %p31, 0, %s30
      %s33 = sadd.s32 1, %s22
      %s34 = scalar_select %p31, %s33, %s22
      %p35 = scmp.ge.s32.totalorder %s34, 1
      %s36 = scalar_select %p35, 0, %s34
      %s37 = sadd.s32 1, %s21
      %s38 = scalar_select %p35, %s37, %s21
      %p39 = scmp.ge.s32.totalorder %s38, 2
      %s40 = scalar_select %p39, 0, %s38
      %s41 = ssub.s32 %s21, %s40
      %s42 = ssub.s32 %s22, %s36
      %s43 = sor.u32 %s41, %s42
      %p44 = scmp.eq.s32.totalorder %s43, 0
      %s46 = sadd.s32 %s45, 1
      %s47 = scalar_select %p44, %s45, %s46
      %p50 = pneg %p44
      %p51 = scmp.eq.s32.totalorder %s14, 1
      %p52 = por %p50, %p51
      %p53 = scmp.ne.s32.totalorder %s45, %s48
      %p54 = scmp.eq.s32.totalorder %s14, 0
      %p55 = por %p53, %p54
      %p56 = scmp.ne.s32.totalorder %s45, %s48
      %p57 = scmp.eq.s32.totalorder %s19, 1
      %p58 = por %p56, %p57
      %p59 = scmp.ne.s32.totalorder %s48, %s49
      %p60 = scmp.eq.s32.totalorder %s19, 0
      %p61 = por %p59, %p60
      %p62 = scmp.ne.s32.totalorder %s48, %s49
      %p63 = scmp.eq.s32.totalorder %s20, 1
      %p64 = por %p62, %p63
      %p66 = scmp.ne.s32.totalorder %s49, %s65
      %p67 = scmp.eq.s32.totalorder %s20, 0
      %p68 = por %p66, %p67
      %s69 = ssub.s32 %s21, %s40
      %s70 = ssub.s32 %s23, %s32
      %s71 = sor.u32 %s69, %s70
      %p72 = scmp.eq.s32.totalorder %s71, 0
      %s74 = sadd.s32 %s73, 1
      %s75 = scalar_select %p72, %s73, %s74
      %p78 = pneg %p72
      %p79 = scmp.eq.s32.totalorder %s14, 1
      %p80 = por %p78, %p79
      %p81 = scmp.ne.s32.totalorder %s73, %s76
      %p82 = scmp.eq.s32.totalorder %s14, 0
      %p83 = por %p81, %p82
      %p84 = scmp.ne.s32.totalorder %s73, %s76
      %p85 = scmp.eq.s32.totalorder %s19, 1
      %p86 = por %p84, %p85
      %p87 = scmp.ne.s32.totalorder %s76, %s77
      %p88 = scmp.eq.s32.totalorder %s19, 0
      %p89 = por %p87, %p88
      %p90 = scmp.ne.s32.totalorder %s76, %s77
      %p91 = scmp.eq.s32.totalorder %s20, 1
      %p92 = por %p90, %p91
      %p94 = scmp.ne.s32.totalorder %s77, %s93
      %p95 = scmp.eq.s32.totalorder %s20, 0
      %p96 = por %p94, %p95
      %s97 = ssub.s32 %s21, %s40
      %s98 = ssub.s32 %s23, %s32
      %s99 = sor.u32 %s97, %s98
      %p100 = scmp.eq.s32.totalorder %s99, 0
      %s102 = sadd.s32 %s101, 1
      %s103 = scalar_select %p100, %s101, %s102
      %p106 = pneg %p100
      %p107 = scmp.eq.s32.totalorder %s14, 1
      %p108 = por %p106, %p107
      %p109 = scmp.ne.s32.totalorder %s101, %s104
      %p110 = scmp.eq.s32.totalorder %s14, 0
      %p111 = por %p109, %p110
      %p112 = scmp.ne.s32.totalorder %s101, %s104
      %p113 = scmp.eq.s32.totalorder %s19, 1
      %p114 = por %p112, %p113
      %p115 = scmp.ne.s32.totalorder %s104, %s105
      %p116 = scmp.eq.s32.totalorder %s19, 0
      %p117 = por %p115, %p116
      %p118 = scmp.ne.s32.totalorder %s104, %s105
      %p119 = scmp.eq.s32.totalorder %s20, 1
      %p120 = por %p118, %p119
      %p122 = scmp.ne.s32.totalorder %s105, %s121
      %p123 = scmp.eq.s32.totalorder %s20, 0
      %p124 = por %p122, %p123
      %s126 = sadd.s32 %s125, 1
      %p129 = scmp.eq.s32.totalorder %s14, 1
      %p130 = scmp.ne.s32.totalorder %s125, %s127
      %p131 = scmp.eq.s32.totalorder %s14, 0
      %p132 = por %p130, %p131
      %p133 = scmp.ne.s32.totalorder %s125, %s127
      %p134 = scmp.eq.s32.totalorder %s19, 1
      %p135 = por %p133, %p134
      %p136 = scmp.ne.s32.totalorder %s127, %s128
      %p137 = scmp.eq.s32.totalorder %s19, 0
      %p138 = por %p136, %p137
      %p139 = scmp.ne.s32.totalorder %s127, %s128
      %p140 = scmp.eq.s32.totalorder %s20, 1
      %p141 = por %p139, %p140
      %p143 = scmp.ne.s32.totalorder %s128, %s142
      %p144 = scmp.eq.s32.totalorder %s20, 0
      %p145 = por %p143, %p144
      %s147 = sadd.s32 %s146, 1
      %p150 = scmp.eq.s32.totalorder %s14, 1
      %p151 = scmp.ne.s32.totalorder %s146, %s148
      %p152 = scmp.eq.s32.totalorder %s14, 0
      %p153 = por %p151, %p152
      %p154 = scmp.ne.s32.totalorder %s146, %s148
      %p155 = scmp.eq.s32.totalorder %s19, 1
      %p156 = por %p154, %p155
      %p157 = scmp.ne.s32.totalorder %s148, %s149
      %p158 = scmp.eq.s32.totalorder %s19, 0
      %p159 = por %p157, %p158
      %p160 = scmp.ne.s32.totalorder %s148, %s149
      %p161 = scmp.eq.s32.totalorder %s20, 1
      %p162 = por %p160, %p161
      %p164 = scmp.ne.s32.totalorder %s149, %s163
      %p165 = scmp.eq.s32.totalorder %s20, 0
      %p166 = por %p164, %p165
      %s167 = ssub.s32 %s21, %s40
      %s168 = ssub.s32 %s22, %s36
      %s169 = sor.u32 %s167, %s168
      %p170 = scmp.eq.s32.totalorder %s169, 0
      %s172 = sadd.s32 %s171, 1
      %s173 = scalar_select %p170, %s171, %s172
      %p176 = pneg %p170
      %p177 = scmp.eq.s32.totalorder %s14, 1
      %p178 = por %p176, %p177
      %p179 = scmp.ne.s32.totalorder %s171, %s174
      %p180 = scmp.eq.s32.totalorder %s14, 0
      %p181 = por %p179, %p180
      %p182 = scmp.ne.s32.totalorder %s171, %s174
      %p183 = scmp.eq.s32.totalorder %s19, 1
      %p184 = por %p182, %p183
      %p185 = scmp.ne.s32.totalorder %s174, %s175
      %p186 = scmp.eq.s32.totalorder %s19, 0
      %p187 = por %p185, %p186
      %p188 = scmp.ne.s32.totalorder %s174, %s175
      %p189 = scmp.eq.s32.totalorder %s20, 1
      %p190 = por %p188, %p189
      %p192 = scmp.ne.s32.totalorder %s175, %s191
      %p193 = scmp.eq.s32.totalorder %s20, 0
      %p194 = por %p192, %p193
      %p195 = scmp.le.s32.totalorder 1, %s14
      %p196 = scmp.lt.s32.totalorder %s14, 3
      %p197 = pnand %p195, %p196
      %p198 = pneg %p197
      // Predicated region
      $region9: #{multi_head_self_attention.3} parent=5 // pred_check
        _
      $region10: #{multi_head_self_attention.3} parent=5 // pred_check_branch
        %200 = sbr.rel (%p197) target = $region12
      $region11: #{multi_head_self_attention.3} parent=5 // pred_region
        %s201 = ssub.s32 %s14, 1
        // Predicated region
        $region13: #{multi_head_self_attention.3} parent=11 // pred_check
          %p202 = pneg %p138
        $region14: #{multi_head_self_attention.3} parent=11 // pred_check_branch
          %204 = sbr.rel (%p202) target = $region16
        $region15: #{multi_head_self_attention.3} parent=11 // pred_region
          _
        $region16: #{multi_head_self_attention.3} parent=11 // pred_fallthru
          _
        // Predicated region
        $region17: #{multi_head_self_attention.3} parent=11 // pred_check
          %p205 = pneg %p159
        $region18: #{multi_head_self_attention.3} parent=11 // pred_check_branch
          %207 = sbr.rel (%p205) target = $region20
        $region19: #{multi_head_self_attention.3} parent=11 // pred_region
          _
        $region20: #{multi_head_self_attention.3} parent=11 // pred_fallthru
          _
      $region12: #{multi_head_self_attention.3} parent=5 // pred_fallthru
        _
      %p208 = scmp.lt.s32.totalorder %s14, 2
      // Predicated region
      $region21: #{multi_head_self_attention.3} parent=5 // pred_check
        %p209 = pneg %p208
      $region22: #{multi_head_self_attention.3} parent=5 // pred_check_branch
        %211 = sbr.rel (%p209) target = $region24
      $region23: #{multi_head_self_attention.3} parent=5 // pred_region
        // Predicated region
        $region25: #{multi_head_self_attention.3} parent=23 // pred_check
          %p212 = pneg %p55
        $region26: #{multi_head_self_attention.3} parent=23 // pred_check_branch
          %214 = sbr.rel (%p212) target = $region28
        $region27: #{multi_head_self_attention.3} parent=23 // pred_region
          %p215 = scmp.lt.s32.totalorder %s21, 1
          %s216 = scalar_select %p215, %s21, 1
          %p217 = scmp.lt.s32.totalorder %s22, 0
          %s218 = scalar_select %p217, %s22, 0
          %s219 = smul.addr %s216, 4
          %s220 = sadd.s32 %s218, %s219
          %s221 = smul.addr %s220, 4
          %s222 = scalar_lea.vmem %s0, %s221
        $region28: #{multi_head_self_attention.3} parent=23 // pred_fallthru
          _
        // Predicated region
        $region29: #{multi_head_self_attention.3} parent=23 // pred_check
          %p223 = pneg %p83
        $region30: #{multi_head_self_attention.3} parent=23 // pred_check_branch
          %225 = sbr.rel (%p223) target = $region32
        $region31: #{multi_head_self_attention.3} parent=23 // pred_region
          %p226 = scmp.lt.s32.totalorder %s21, 1
          %s227 = scalar_select %p226, %s21, 1
          %p228 = scmp.lt.s32.totalorder %s23, 0
          %s229 = scalar_select %p228, %s23, 0
          %s230 = smul.addr %s227, 4
          %s231 = sadd.s32 %s229, %s230
          %s232 = smul.addr %s231, 4
          %s233 = scalar_lea.vmem %s1, %s232
        $region32: #{multi_head_self_attention.3} parent=23 // pred_fallthru
          _
        // Predicated region
        $region33: #{multi_head_self_attention.3} parent=23 // pred_check
          %p234 = pneg %p111
        $region34: #{multi_head_self_attention.3} parent=23 // pred_check_branch
          %236 = sbr.rel (%p234) target = $region36
        $region35: #{multi_head_self_attention.3} parent=23 // pred_region
          %p237 = scmp.lt.s32.totalorder %s21, 1
          %s238 = scalar_select %p237, %s21, 1
          %p239 = scmp.lt.s32.totalorder %s23, 0
          %s240 = scalar_select %p239, %s23, 0
          %s241 = smul.addr %s238, 4
          %s242 = sadd.s32 %s240, %s241
          %s243 = smul.addr %s242, 4
          %s244 = scalar_lea.vmem %s2, %s243
        $region36: #{multi_head_self_attention.3} parent=23 // pred_fallthru
          _
      $region24: #{multi_head_self_attention.3} parent=5 // pred_fallthru
        _
      %p245 = scmp.le.s32.totalorder 1, %s14
      %p246 = scmp.lt.s32.totalorder %s14, 3
      %p247 = pnand %p245, %p246
      %p248 = pneg %p247
      // Predicated region
      $region37: #{multi_head_self_attention.3} parent=5 // pred_check
        _
      $region38: #{multi_head_self_attention.3} parent=5 // pred_check_branch
        %250 = sbr.rel (%p247) target = $region40
      $region39: #{multi_head_self_attention.3} parent=5 // pred_region
        %s251 = ssub.s32 %s14, 1
        %p252 = scmp.lt.s32.totalorder %s24, 1
        %s253 = scalar_select %p252, %s24, 1
        %p254 = scmp.lt.s32.totalorder %s25, 0
        %s255 = scalar_select %p254, %s25, 0
        %s256 = smul.addr %s253, 4
        %s257 = sadd.s32 %s255, %s256
        %s258 = smul.addr %s257, 4
        %s259 = scalar_lea.vmem %s0, %s258
        %p260 = pneg %p61
        %p261 = pneg %p58
        %p262 = scmp.lt.s32.totalorder %s24, 1
        %s263 = scalar_select %p262, %s24, 1
        %p264 = scmp.lt.s32.totalorder %s26, 0
        %s265 = scalar_select %p264, %s26, 0
        %s266 = smul.addr %s263, 4
        %s267 = sadd.s32 %s265, %s266
        %s268 = smul.addr %s267, 4
        %s269 = scalar_lea.vmem %s1, %s268
        %p270 = pneg %p89
        %p271 = pneg %p86
        %p272 = scmp.lt.s32.totalorder %s24, 1
        %s273 = scalar_select %p272, %s24, 1
        %p274 = scmp.lt.s32.totalorder %s26, 0
        %s275 = scalar_select %p274, %s26, 0
        %s276 = smul.addr %s273, 4
        %s277 = sadd.s32 %s275, %s276
        %s278 = smul.addr %s277, 4
        %s279 = scalar_lea.vmem %s2, %s278
        %p280 = pneg %p117
        %p281 = pneg %p114
        %p282 = pneg %p138
        %p283 = pneg %p135
        %p284 = pneg %p159
        %p285 = pneg %p156
        %p286 = pneg %p187
        %p287 = pneg %p184
        %s288 = sand.u32 %s174, 1
        %s289 = scalar_lea.sflag [#allocation7], %s288
        %s290 = sand.u32 %s174, 1
        %s291 = smul.addr %s290, 8
        %s292 = scalar_lea.vmem [#allocation6], %s291
        %p293 = scmp.lt.s32.totalorder %s24, 1
        %s294 = scalar_select %p293, %s24, 1
        %p295 = scmp.lt.s32.totalorder %s25, 0
        %s296 = scalar_select %p295, %s25, 0
        %s297 = smul.addr %s294, 4
        %s298 = sadd.s32 %s296, %s297
        %s299 = smul.addr %s298, 4
        %s300 = scalar_lea.vmem %s0, %s299
        %p301 = scmp.lt.s32.totalorder %s24, 1
        %s302 = scalar_select %p301, %s24, 1
        %p303 = scmp.lt.s32.totalorder %s26, 0
        %s304 = scalar_select %p303, %s26, 0
        %s305 = smul.addr %s302, 4
        %s306 = sadd.s32 %s304, %s305
        %s307 = smul.addr %s306, 4
        %s308 = scalar_lea.vmem %s1, %s307
        %p309 = scmp.lt.s32.totalorder %s24, 1
        %s310 = scalar_select %p309, %s24, 1
        %p311 = scmp.lt.s32.totalorder %s26, 0
        %s312 = scalar_select %p311, %s26, 0
        %s313 = smul.addr %s310, 4
        %s314 = sadd.s32 %s312, %s313
        %s315 = smul.addr %s314, 4
        %s316 = scalar_lea.vmem %s2, %s315
        %p318 = scmp.eq.s32.totalorder %s26, 0
        // Predicated region
        $region41: #{multi_head_self_attention.3} parent=39 // pred_check
          %p319 = pneg %p318
        $region42: #{multi_head_self_attention.3} parent=39 // pred_check_branch
          %321 = sbr.rel (%p319) target = $region44
        $region43: #{multi_head_self_attention.3} parent=39 // pred_region
          %vm322 = vcmask 7168
          %323 = vst.msk [vmem:[#allocation2] sm:$0xff] %vm322, -inf
          %324 = vst.msk [vmem:[#allocation2 + $0x8] sm:$0xff] %vm322, -inf
          %325 = vst.msk [vmem:[#allocation2 + $0x10] sm:$0xff] %vm322, -inf
          %326 = vst.msk [vmem:[#allocation2 + $0x18] sm:$0xff] %vm322, -inf
          %327 = vst.msk [vmem:[#allocation3] sm:$0xff] %vm322, 0.0
          %328 = vst.msk [vmem:[#allocation3 + $0x8] sm:$0xff] %vm322, 0.0
          %329 = vst.msk [vmem:[#allocation3 + $0x10] sm:$0xff] %vm322, 0.0
          %330 = vst.msk [vmem:[#allocation3 + $0x18] sm:$0xff] %vm322, 0.0
          %vm331 = vcmask 64512
          %332 = vst.msk [vmem:[#allocation4] sm:$0xff] %vm331, 0.0
          %333 = vst.msk [vmem:[#allocation4 + $0x8] sm:$0xff] %vm331, 0.0
          %334 = vst.msk [vmem:[#allocation4 + $0x10] sm:$0xff] %vm331, 0.0
          %335 = vst.msk [vmem:[#allocation4 + $0x18] sm:$0xff] %vm331, 0.0
        $region44: #{multi_head_self_attention.3} parent=39 // pred_fallthru
          _
        %v336 = vld [vmem:[%s300] sm:$0xf]
        %v337 = vld [vmem:[%s300 + $0x4] sm:$0xf]
        %v338 = vld [vmem:[%s300 + $0x8] sm:$0xf]
        %v339 = vld [vmem:[%s300 + $0xc] sm:$0xf]
        %v340 = vld [vmem:[%s308] sm:$0xf]
        %v341 = vld [vmem:[%s308 + $0x4] sm:$0xf]
        %v342 = vld [vmem:[%s308 + $0x8] sm:$0xf]
        %v343 = vld [vmem:[%s308 + $0xc] sm:$0xf]
        %v344 = vld [vmem:[%s316] sm:$0xf]
        %v345 = vld [vmem:[%s316 + $0x4] sm:$0xf]
        %v346 = vld [vmem:[%s316 + $0x8] sm:$0xf]
        %v347 = vld [vmem:[%s316 + $0xc] sm:$0xf]
        %vm348 = vcmask 64512
        %v350 = vsel %vm348, %v336, 0
        %v353 = vsel %vm348, %v340, 0
        %355 = vmatprep.subr.bf16.mxu0 0
        %356 = vmatpush1.bf16.xpose.msra.mxu0 %v353
        %357 = vmatprep.subr.bf16.mxu0 0
        %358 = vmatpush1.bf16.xpose.msra.mxu0 0
        %359 = vmatprep.subr.bf16.mxu0 0
        %360 = vmatpush1.bf16.xpose.msra.mxu0 0
        %361 = vmatprep.subr.bf16.mxu0 0
        %362 = vmatpush1.bf16.xpose.msra.mxu0 0
        %363 = vmatprep.subr.bf16.mxu0 0
        %364 = vmatpush1.bf16.xpose.msra.mxu0 0
        %365 = vmatprep.subr.bf16.mxu0 0
        %366 = vmatpush1.bf16.xpose.msra.mxu0 0
        %367 = vmatprep.subr.bf16.mxu0 0
        %368 = vmatpush1.bf16.xpose.msra.mxu0 0
        %369 = vmatprep.subr.bf16.mxu0 0
        %370 = vmatpush1.bf16.xpose.msra.mxu0 0
        %371 = vmatprep.subr.bf16.mxu0 0
        %372 = vmatpush1.bf16.xpose.msra.mxu0 0
        %373 = vmatprep.subr.bf16.mxu0 0
        %374 = vmatpush1.bf16.xpose.msra.mxu0 0
        %375 = vmatprep.subr.bf16.mxu0 0
        %376 = vmatpush1.bf16.xpose.msra.mxu0 0
        %377 = vmatprep.subr.bf16.mxu0 0
        %378 = vmatpush1.bf16.xpose.msra.mxu0 0
        %379 = vmatprep.subr.bf16.mxu0 0
        %380 = vmatpush1.bf16.xpose.msra.mxu0 0
        %381 = vmatprep.subr.bf16.mxu0 0
        %382 = vmatpush1.bf16.xpose.msra.mxu0 0
        %383 = vmatprep.subr.bf16.mxu0 0
        %384 = vmatpush1.bf16.xpose.msra.mxu0 0
        %385 = vmatprep.subr.bf16.mxu0 0
        %386 = vmatpush1.bf16.xpose.msra.mxu0 0
        %387 = vmatprep.mubr.bf16.mxu0 0
        %388 = vmatmul.mubr.bf16.gmra.mrb[0].mxu0 %v350
        %v389 = vpop.f32.mrb[0].mxu0
        %v390 = vadd.f32 0.0, %v389
        %v391 = vpop.f32.mrb[0].mxu0
        %v392 = vpop.f32.mrb[0].mxu0
        %v393 = vpop.f32.mrb[0].mxu0
        %394 = vdwg.mxu0
        %v396 = vsel %vm348, %v337, 0
        %v399 = vsel %vm348, %v341, 0
        %401 = vmatprep.subr.bf16.mxu0 0
        %402 = vmatpush1.bf16.xpose.msra.mxu0 %v399
        %403 = vmatprep.subr.bf16.mxu0 0
        %404 = vmatpush1.bf16.xpose.msra.mxu0 0
        %405 = vmatprep.subr.bf16.mxu0 0
        %406 = vmatpush1.bf16.xpose.msra.mxu0 0
        %407 = vmatprep.subr.bf16.mxu0 0
        %408 = vmatpush1.bf16.xpose.msra.mxu0 0
        %409 = vmatprep.subr.bf16.mxu0 0
        %410 = vmatpush1.bf16.xpose.msra.mxu0 0
        %411 = vmatprep.subr.bf16.mxu0 0
        %412 = vmatpush1.bf16.xpose.msra.mxu0 0
        %413 = vmatprep.subr.bf16.mxu0 0
        %414 = vmatpush1.bf16.xpose.msra.mxu0 0
        %415 = vmatprep.subr.bf16.mxu0 0
        %416 = vmatpush1.bf16.xpose.msra.mxu0 0
        %417 = vmatprep.subr.bf16.mxu0 0
        %418 = vmatpush1.bf16.xpose.msra.mxu0 0
        %419 = vmatprep.subr.bf16.mxu0 0
        %420 = vmatpush1.bf16.xpose.msra.mxu0 0
        %421 = vmatprep.subr.bf16.mxu0 0
        %422 = vmatpush1.bf16.xpose.msra.mxu0 0
        %423 = vmatprep.subr.bf16.mxu0 0
        %424 = vmatpush1.bf16.xpose.msra.mxu0 0
        %425 = vmatprep.subr.bf16.mxu0 0
        %426 = vmatpush1.bf16.xpose.msra.mxu0 0
        %427 = vmatprep.subr.bf16.mxu0 0
        %428 = vmatpush1.bf16.xpose.msra.mxu0 0
        %429 = vmatprep.subr.bf16.mxu0 0
        %430 = vmatpush1.bf16.xpose.msra.mxu0 0
        %431 = vmatprep.subr.bf16.mxu0 0
        %432 = vmatpush1.bf16.xpose.msra.mxu0 0
        %433 = vmatprep.mubr.bf16.mxu0 0
        %434 = vmatmul.mubr.bf16.gmra.mrb[0].mxu0 %v396
        %v435 = vpop.f32.mrb[0].mxu0
        %v436 = vadd.f32 0.0, %v435
        %v437 = vpop.f32.mrb[0].mxu0
        %v438 = vpop.f32.mrb[0].mxu0
        %v439 = vpop.f32.mrb[0].mxu0
        %440 = vdwg.mxu0
        %v442 = vsel %vm348, %v338, 0
        %v445 = vsel %vm348, %v342, 0
        %447 = vmatprep.subr.bf16.mxu0 0
        %448 = vmatpush1.bf16.xpose.msra.mxu0 %v445
        %449 = vmatprep.subr.bf16.mxu0 0
        %450 = vmatpush1.bf16.xpose.msra.mxu0 0
        %451 = vmatprep.subr.bf16.mxu0 0
        %452 = vmatpush1.bf16.xpose.msra.mxu0 0
        %453 = vmatprep.subr.bf16.mxu0 0
        %454 = vmatpush1.bf16.xpose.msra.mxu0 0
        %455 = vmatprep.subr.bf16.mxu0 0
        %456 = vmatpush1.bf16.xpose.msra.mxu0 0
        %457 = vmatprep.subr.bf16.mxu0 0
        %458 = vmatpush1.bf16.xpose.msra.mxu0 0
        %459 = vmatprep.subr.bf16.mxu0 0
        %460 = vmatpush1.bf16.xpose.msra.mxu0 0
        %461 = vmatprep.subr.bf16.mxu0 0
        %462 = vmatpush1.bf16.xpose.msra.mxu0 0
        %463 = vmatprep.subr.bf16.mxu0 0
        %464 = vmatpush1.bf16.xpose.msra.mxu0 0
        %465 = vmatprep.subr.bf16.mxu0 0
        %466 = vmatpush1.bf16.xpose.msra.mxu0 0
        %467 = vmatprep.subr.bf16.mxu0 0
        %468 = vmatpush1.bf16.xpose.msra.mxu0 0
        %469 = vmatprep.subr.bf16.mxu0 0
        %470 = vmatpush1.bf16.xpose.msra.mxu0 0
        %471 = vmatprep.subr.bf16.mxu0 0
        %472 = vmatpush1.bf16.xpose.msra.mxu0 0
        %473 = vmatprep.subr.bf16.mxu0 0
        %474 = vmatpush1.bf16.xpose.msra.mxu0 0
        %475 = vmatprep.subr.bf16.mxu0 0
        %476 = vmatpush1.bf16.xpose.msra.mxu0 0
        %477 = vmatprep.subr.bf16.mxu0 0
        %478 = vmatpush1.bf16.xpose.msra.mxu0 0
        %479 = vmatprep.mubr.bf16.mxu0 0
        %480 = vmatmul.mubr.bf16.gmra.mrb[0].mxu0 %v442
        %v481 = vpop.f32.mrb[0].mxu0
        %v482 = vadd.f32 0.0, %v481
        %v483 = vpop.f32.mrb[0].mxu0
        %v484 = vpop.f32.mrb[0].mxu0
        %v485 = vpop.f32.mrb[0].mxu0
        %486 = vdwg.mxu0
        %v488 = vsel %vm348, %v339, 0
        %v491 = vsel %vm348, %v343, 0
        %493 = vmatprep.subr.bf16.mxu0 0
        %494 = vmatpush1.bf16.xpose.msra.mxu0 %v491
        %495 = vmatprep.subr.bf16.mxu0 0
        %496 = vmatpush1.bf16.xpose.msra.mxu0 0
        %497 = vmatprep.subr.bf16.mxu0 0
        %498 = vmatpush1.bf16.xpose.msra.mxu0 0
        %499 = vmatprep.subr.bf16.mxu0 0
        %500 = vmatpush1.bf16.xpose.msra.mxu0 0
        %501 = vmatprep.subr.bf16.mxu0 0
        %502 = vmatpush1.bf16.xpose.msra.mxu0 0
        %503 = vmatprep.subr.bf16.mxu0 0
        %504 = vmatpush1.bf16.xpose.msra.mxu0 0
        %505 = vmatprep.subr.bf16.mxu0 0
        %506 = vmatpush1.bf16.xpose.msra.mxu0 0
        %507 = vmatprep.subr.bf16.mxu0 0
        %508 = vmatpush1.bf16.xpose.msra.mxu0 0
        %509 = vmatprep.subr.bf16.mxu0 0
        %510 = vmatpush1.bf16.xpose.msra.mxu0 0
        %511 = vmatprep.subr.bf16.mxu0 0
        %512 = vmatpush1.bf16.xpose.msra.mxu0 0
        %513 = vmatprep.subr.bf16.mxu0 0
        %514 = vmatpush1.bf16.xpose.msra.mxu0 0
        %515 = vmatprep.subr.bf16.mxu0 0
        %516 = vmatpush1.bf16.xpose.msra.mxu0 0
        %517 = vmatprep.subr.bf16.mxu0 0
        %518 = vmatpush1.bf16.xpose.msra.mxu0 0
        %519 = vmatprep.subr.bf16.mxu0 0
        %520 = vmatpush1.bf16.xpose.msra.mxu0 0
        %521 = vmatprep.subr.bf16.mxu0 0
        %522 = vmatpush1.bf16.xpose.msra.mxu0 0
        %523 = vmatprep.subr.bf16.mxu0 0
        %524 = vmatpush1.bf16.xpose.msra.mxu0 0
        %525 = vmatprep.mubr.bf16.mxu0 0
        %526 = vmatmul.mubr.bf16.gmra.mrb[0].mxu0 %v488
        %v527 = vpop.f32.mrb[0].mxu0
        %v528 = vadd.f32 0.0, %v527
        %v529 = vpop.f32.mrb[0].mxu0
        %v530 = vpop.f32.mrb[0].mxu0
        %v531 = vpop.f32.mrb[0].mxu0
        %532 = vdwg.mxu0
        %v533 = vld [vmem:[#allocation2] sm:$0xff]
        %v534 = vld [vmem:[#allocation2 + $0x8] sm:$0xff]
        %v535 = vld [vmem:[#allocation2 + $0x10] sm:$0xff]
        %v536 = vld [vmem:[#allocation2 + $0x18] sm:$0xff]
        %v537 = vsel %vm348, %v390, -inf
        %538 = vmax.xlane.f32.xlu0 %v537
        %v539 = vpop.xlane.xlu0 %538
        %v540 = vsel %vm348, %v436, -inf
        %541 = vmax.xlane.f32.xlu0 %v540
        %v542 = vpop.xlane.xlu0 %541
        %v543 = vsel %vm348, %v482, -inf
        %544 = vmax.xlane.f32.xlu0 %v543
        %v545 = vpop.xlane.xlu0 %544
        %v546 = vsel %vm348, %v528, -inf
        %547 = vmax.xlane.f32.xlu0 %v546
        %v548 = vpop.xlane.xlu0 %547
        %v549 = vmax.f32 %v533, %v539
        %v550 = vmax.f32 %v534, %v542
        %v551 = vmax.f32 %v535, %v545
        %v552 = vmax.f32 %v536, %v548
        %v553 = vsub.f32 %v533, %v549
        %v554 = vsub.f32 %v534, %v550
        %v555 = vsub.f32 %v535, %v551
        %v556 = vsub.f32 %v536, %v552
        %v557 = vmul.f32 %v553, 1.442695
        %v558 = vpow.pop %v557
        %v559 = vmul.f32 %v554, 1.442695
        %v560 = vpow.pop %v559
        %v561 = vmul.f32 %v555, 1.442695
        %v562 = vpow.pop %v561
        %v563 = vmul.f32 %v556, 1.442695
        %v564 = vpow.pop %v563
        %566 = vset.pattern.permute.xlu0 0
        %567 = vperm.xlu0 %566, %v549
        %v568 = vpop.permute.xlu0 %567
        %571 = vset.pattern.permute.xlu0 0
        %572 = vperm.xlu0 %571, %v550
        %v573 = vpop.permute.xlu0 %572
        %576 = vset.pattern.permute.xlu0 0
        %577 = vperm.xlu0 %576, %v551
        %v578 = vpop.permute.xlu0 %577
        %581 = vset.pattern.permute.xlu0 0
        %582 = vperm.xlu0 %581, %v552
        %v583 = vpop.permute.xlu0 %582
        %v585 = vsub.f32 %v390, %v568
        %v586 = vsub.f32 %v436, %v573
        %v587 = vsub.f32 %v482, %v578
        %v588 = vsub.f32 %v528, %v583
        %v589 = vmul.f32 %v585, 1.442695
        %v590 = vpow.pop %v589
        %v591 = vmul.f32 %v586, 1.442695
        %v592 = vpow.pop %v591
        %v593 = vmul.f32 %v587, 1.442695
        %v594 = vpow.pop %v593
        %v595 = vmul.f32 %v588, 1.442695
        %v596 = vpow.pop %v595
        %v597 = vld [vmem:[#allocation3] sm:$0xff]
        %v598 = vld [vmem:[#allocation3 + $0x8] sm:$0xff]
        %v599 = vld [vmem:[#allocation3 + $0x10] sm:$0xff]
        %v600 = vld [vmem:[#allocation3 + $0x18] sm:$0xff]
        %v601 = vmul.f32 %v558, %v597
        %v602 = vmul.f32 %v560, %v598
        %v603 = vmul.f32 %v562, %v599
        %v604 = vmul.f32 %v564, %v600
        %v605 = vsel %vm348, %v590, 0.0
        %606 = vadd.xlane.f32.xlu0 %v605
        %v607 = vpop.xlane.xlu0 %606
        %v608 = vsel %vm348, %v592, 0.0
        %609 = vadd.xlane.f32.xlu0 %v608
        %v610 = vpop.xlane.xlu0 %609
        %v611 = vsel %vm348, %v594, 0.0
        %612 = vadd.xlane.f32.xlu0 %v611
        %v613 = vpop.xlane.xlu0 %612
        %v614 = vsel %vm348, %v596, 0.0
        %615 = vadd.xlane.f32.xlu0 %v614
        %v616 = vpop.xlane.xlu0 %615
        %v617 = vadd.f32 %v601, %v607
        %v618 = vadd.f32 %v602, %v610
        %v619 = vadd.f32 %v603, %v613
        %v620 = vadd.f32 %v604, %v616
        %vm621 = vcmask 7168
        %622 = vst.msk [vmem:[#allocation3] sm:$0xff] %vm621, %v617
        %623 = vst.msk [vmem:[#allocation3 + $0x8] sm:$0xff] %vm621, %v618
        %624 = vst.msk [vmem:[#allocation3 + $0x10] sm:$0xff] %vm621, %v619
        %625 = vst.msk [vmem:[#allocation3 + $0x18] sm:$0xff] %vm621, %v620
        %v626 = vld [vmem:[#allocation4] sm:$0xff]
        %v627 = vld [vmem:[#allocation4 + $0x8] sm:$0xff]
        %v628 = vld [vmem:[#allocation4 + $0x10] sm:$0xff]
        %v629 = vld [vmem:[#allocation4 + $0x18] sm:$0xff]
        %631 = vset.pattern.permute.xlu0 0
        %632 = vperm.xlu0 %631, %v558
        %v633 = vpop.permute.xlu0 %632
        %636 = vset.pattern.permute.xlu0 0
        %637 = vperm.xlu0 %636, %v560
        %v638 = vpop.permute.xlu0 %637
        %641 = vset.pattern.permute.xlu0 0
        %642 = vperm.xlu0 %641, %v562
        %v643 = vpop.permute.xlu0 %642
        %646 = vset.pattern.permute.xlu0 0
        %647 = vperm.xlu0 %646, %v564
        %v648 = vpop.permute.xlu0 %647
        %v650 = vmul.f32 %v633, %v626
        %v651 = vmul.f32 %v638, %v627
        %v652 = vmul.f32 %v643, %v628
        %v653 = vmul.f32 %v648, %v629
        %v654 = vpack.c.bf16 %v590, %v590
        %v655 = vpack.c.bf16 %v592, %v592
        %v656 = vpack.c.bf16 %v594, %v594
        %v657 = vpack.c.bf16 %v596, %v596
        %v659 = vsel %vm348, %v654, 0
        %vm661 = vcmask 1043456
        %v663 = vsel %vm661, %v344, 0
        %665 = vmatprep.subr.bf16.mxu0 0
        %666 = vmatpush1.bf16.msra.mxu0 %v663
        %667 = vmatprep.subr.bf16.mxu0 0
        %668 = vmatpush1.bf16.msra.mxu0 0
        %669 = vmatprep.subr.bf16.mxu0 0
        %670 = vmatpush1.bf16.msra.mxu0 0
        %671 = vmatprep.subr.bf16.mxu0 0
        %672 = vmatpush1.bf16.msra.mxu0 0
        %673 = vmatprep.subr.bf16.mxu0 0
        %674 = vmatpush1.bf16.msra.mxu0 0
        %675 = vmatprep.subr.bf16.mxu0 0
        %676 = vmatpush1.bf16.msra.mxu0 0
        %677 = vmatprep.subr.bf16.mxu0 0
        %678 = vmatpush1.bf16.msra.mxu0 0
        %679 = vmatprep.subr.bf16.mxu0 0
        %680 = vmatpush1.bf16.msra.mxu0 0
        %681 = vmatprep.subr.bf16.mxu0 0
        %682 = vmatpush1.bf16.msra.mxu0 0
        %683 = vmatprep.subr.bf16.mxu0 0
        %684 = vmatpush1.bf16.msra.mxu0 0
        %685 = vmatprep.subr.bf16.mxu0 0
        %686 = vmatpush1.bf16.msra.mxu0 0
        %687 = vmatprep.subr.bf16.mxu0 0
        %688 = vmatpush1.bf16.msra.mxu0 0
        %689 = vmatprep.subr.bf16.mxu0 0
        %690 = vmatpush1.bf16.msra.mxu0 0
        %691 = vmatprep.subr.bf16.mxu0 0
        %692 = vmatpush1.bf16.msra.mxu0 0
        %693 = vmatprep.subr.bf16.mxu0 0
        %694 = vmatpush1.bf16.msra.mxu0 0
        %695 = vmatprep.subr.bf16.mxu0 0
        %696 = vmatpush1.bf16.msra.mxu0 0
        %697 = vmatprep.mubr.bf16.mxu0 0
        %698 = vmatmul.mubr.bf16.gmra.mrb[0].mxu0 %v659
        %v699 = vpop.f32.mrb[0].mxu0
        %v700 = vadd.f32 0.0, %v699
        %v701 = vpop.f32.mrb[0].mxu0
        %v702 = vpop.f32.mrb[0].mxu0
        %v703 = vpop.f32.mrb[0].mxu0
        %704 = vdwg.mxu0
        %v706 = vsel %vm348, %v655, 0
        %v709 = vsel %vm661, %v345, 0
        %711 = vmatprep.subr.bf16.mxu0 0
        %712 = vmatpush1.bf16.msra.mxu0 %v709
        %713 = vmatprep.subr.bf16.mxu0 0
        %714 = vmatpush1.bf16.msra.mxu0 0
        %715 = vmatprep.subr.bf16.mxu0 0
        %716 = vmatpush1.bf16.msra.mxu0 0
        %717 = vmatprep.subr.bf16.mxu0 0
        %718 = vmatpush1.bf16.msra.mxu0 0
        %719 = vmatprep.subr.bf16.mxu0 0
        %720 = vmatpush1.bf16.msra.mxu0 0
        %721 = vmatprep.subr.bf16.mxu0 0
        %722 = vmatpush1.bf16.msra.mxu0 0
        %723 = vmatprep.subr.bf16.mxu0 0
        %724 = vmatpush1.bf16.msra.mxu0 0
        %725 = vmatprep.subr.bf16.mxu0 0
        %726 = vmatpush1.bf16.msra.mxu0 0
        %727 = vmatprep.subr.bf16.mxu0 0
        %728 = vmatpush1.bf16.msra.mxu0 0
        %729 = vmatprep.subr.bf16.mxu0 0
        %730 = vmatpush1.bf16.msra.mxu0 0
        %731 = vmatprep.subr.bf16.mxu0 0
        %732 = vmatpush1.bf16.msra.mxu0 0
        %733 = vmatprep.subr.bf16.mxu0 0
        %734 = vmatpush1.bf16.msra.mxu0 0
        %735 = vmatprep.subr.bf16.mxu0 0
        %736 = vmatpush1.bf16.msra.mxu0 0
        %737 = vmatprep.subr.bf16.mxu0 0
        %738 = vmatpush1.bf16.msra.mxu0 0
        %739 = vmatprep.subr.bf16.mxu0 0
        %740 = vmatpush1.bf16.msra.mxu0 0
        %741 = vmatprep.subr.bf16.mxu0 0
        %742 = vmatpush1.bf16.msra.mxu0 0
        %743 = vmatprep.mubr.bf16.mxu0 0
        %744 = vmatmul.mubr.bf16.gmra.mrb[0].mxu0 %v706
        %v745 = vpop.f32.mrb[0].mxu0
        %v746 = vadd.f32 0.0, %v745
        %v747 = vpop.f32.mrb[0].mxu0
        %v748 = vpop.f32.mrb[0].mxu0
        %v749 = vpop.f32.mrb[0].mxu0
        %750 = vdwg.mxu0
        %v752 = vsel %vm348, %v656, 0
        %v755 = vsel %vm661, %v346, 0
        %757 = vmatprep.subr.bf16.mxu0 0
        %758 = vmatpush1.bf16.msra.mxu0 %v755
        %759 = vmatprep.subr.bf16.mxu0 0
        %760 = vmatpush1.bf16.msra.mxu0 0
        %761 = vmatprep.subr.bf16.mxu0 0
        %762 = vmatpush1.bf16.msra.mxu0 0
        %763 = vmatprep.subr.bf16.mxu0 0
        %764 = vmatpush1.bf16.msra.mxu0 0
        %765 = vmatprep.subr.bf16.mxu0 0
        %766 = vmatpush1.bf16.msra.mxu0 0
        %767 = vmatprep.subr.bf16.mxu0 0
        %768 = vmatpush1.bf16.msra.mxu0 0
        %769 = vmatprep.subr.bf16.mxu0 0
        %770 = vmatpush1.bf16.msra.mxu0 0
        %771 = vmatprep.subr.bf16.mxu0 0
        %772 = vmatpush1.bf16.msra.mxu0 0
        %773 = vmatprep.subr.bf16.mxu0 0
        %774 = vmatpush1.bf16.msra.mxu0 0
        %775 = vmatprep.subr.bf16.mxu0 0
        %776 = vmatpush1.bf16.msra.mxu0 0
        %777 = vmatprep.subr.bf16.mxu0 0
        %778 = vmatpush1.bf16.msra.mxu0 0
        %779 = vmatprep.subr.bf16.mxu0 0
        %780 = vmatpush1.bf16.msra.mxu0 0
        %781 = vmatprep.subr.bf16.mxu0 0
        %782 = vmatpush1.bf16.msra.mxu0 0
        %783 = vmatprep.subr.bf16.mxu0 0
        %784 = vmatpush1.bf16.msra.mxu0 0
        %785 = vmatprep.subr.bf16.mxu0 0
        %786 = vmatpush1.bf16.msra.mxu0 0
        %787 = vmatprep.subr.bf16.mxu0 0
        %788 = vmatpush1.bf16.msra.mxu0 0
        %789 = vmatprep.mubr.bf16.mxu0 0
        %790 = vmatmul.mubr.bf16.gmra.mrb[0].mxu0 %v752
        %v791 = vpop.f32.mrb[0].mxu0
        %v792 = vadd.f32 0.0, %v791
        %v793 = vpop.f32.mrb[0].mxu0
        %v794 = vpop.f32.mrb[0].mxu0
        %v795 = vpop.f32.mrb[0].mxu0
        %796 = vdwg.mxu0
        %v798 = vsel %vm348, %v657, 0
        %v801 = vsel %vm661, %v347, 0
        %803 = vmatprep.subr.bf16.mxu0 0
        %804 = vmatpush1.bf16.msra.mxu0 %v801
        %805 = vmatprep.subr.bf16.mxu0 0
        %806 = vmatpush1.bf16.msra.mxu0 0
        %807 = vmatprep.subr.bf16.mxu0 0
        %808 = vmatpush1.bf16.msra.mxu0 0
        %809 = vmatprep.subr.bf16.mxu0 0
        %810 = vmatpush1.bf16.msra.mxu0 0
        %811 = vmatprep.subr.bf16.mxu0 0
        %812 = vmatpush1.bf16.msra.mxu0 0
        %813 = vmatprep.subr.bf16.mxu0 0
        %814 = vmatpush1.bf16.msra.mxu0 0
        %815 = vmatprep.subr.bf16.mxu0 0
        %816 = vmatpush1.bf16.msra.mxu0 0
        %817 = vmatprep.subr.bf16.mxu0 0
        %818 = vmatpush1.bf16.msra.mxu0 0
        %819 = vmatprep.subr.bf16.mxu0 0
        %820 = vmatpush1.bf16.msra.mxu0 0
        %821 = vmatprep.subr.bf16.mxu0 0
        %822 = vmatpush1.bf16.msra.mxu0 0
        %823 = vmatprep.subr.bf16.mxu0 0
        %824 = vmatpush1.bf16.msra.mxu0 0
        %825 = vmatprep.subr.bf16.mxu0 0
        %826 = vmatpush1.bf16.msra.mxu0 0
        %827 = vmatprep.subr.bf16.mxu0 0
        %828 = vmatpush1.bf16.msra.mxu0 0
        %829 = vmatprep.subr.bf16.mxu0 0
        %830 = vmatpush1.bf16.msra.mxu0 0
        %831 = vmatprep.subr.bf16.mxu0 0
        %832 = vmatpush1.bf16.msra.mxu0 0
        %833 = vmatprep.subr.bf16.mxu0 0
        %834 = vmatpush1.bf16.msra.mxu0 0
        %835 = vmatprep.mubr.bf16.mxu0 0
        %836 = vmatmul.mubr.bf16.gmra.mrb[0].mxu0 %v798
        %v837 = vpop.f32.mrb[0].mxu0
        %v838 = vadd.f32 0.0, %v837
        %v839 = vpop.f32.mrb[0].mxu0
        %v840 = vpop.f32.mrb[0].mxu0
        %v841 = vpop.f32.mrb[0].mxu0
        %842 = vdwg.mxu0
        %v843 = vadd.f32 %v650, %v700
        %v844 = vadd.f32 %v651, %v746
        %v845 = vadd.f32 %v652, %v792
        %v846 = vadd.f32 %v653, %v838
        %847 = vst.msk [vmem:[#allocation4] sm:$0xff] %vm348, %v843
        %848 = vst.msk [vmem:[#allocation4 + $0x8] sm:$0xff] %vm348, %v844
        %849 = vst.msk [vmem:[#allocation4 + $0x10] sm:$0xff] %vm348, %v845
        %850 = vst.msk [vmem:[#allocation4 + $0x18] sm:$0xff] %vm348, %v846
        %851 = vst.msk [vmem:[#allocation2] sm:$0xff] %vm621, %v549
        %852 = vst.msk [vmem:[#allocation2 + $0x8] sm:$0xff] %vm621, %v550
        %853 = vst.msk [vmem:[#allocation2 + $0x10] sm:$0xff] %vm621, %v551
        %854 = vst.msk [vmem:[#allocation2 + $0x18] sm:$0xff] %vm621, %v552
        // Predicated region
        $region45: #{multi_head_self_attention.3} parent=39 // pred_check
          %p855 = pneg %p318
        $region46: #{multi_head_self_attention.3} parent=39 // pred_check_branch
          %857 = sbr.rel (%p855) target = $region48
        $region47: #{multi_head_self_attention.3} parent=39 // pred_region
          %v858 = vld [vmem:[#allocation4] sm:$0xff]
          %v859 = vld [vmem:[#allocation4 + $0x8] sm:$0xff]
          %v860 = vld [vmem:[#allocation4 + $0x10] sm:$0xff]
          %v861 = vld [vmem:[#allocation4 + $0x18] sm:$0xff]
          %v862 = vld [vmem:[#allocation3] sm:$0xff]
          %v863 = vld [vmem:[#allocation3 + $0x8] sm:$0xff]
          %v864 = vld [vmem:[#allocation3 + $0x10] sm:$0xff]
          %v865 = vld [vmem:[#allocation3 + $0x18] sm:$0xff]
          %867 = vset.pattern.permute.xlu0 0
          %868 = vperm.xlu0 %867, %v862
          %v869 = vpop.permute.xlu0 %868
          %872 = vset.pattern.permute.xlu0 0
          %873 = vperm.xlu0 %872, %v863
          %v874 = vpop.permute.xlu0 %873
          %877 = vset.pattern.permute.xlu0 0
          %878 = vperm.xlu0 %877, %v864
          %v879 = vpop.permute.xlu0 %878
          %882 = vset.pattern.permute.xlu0 0
          %883 = vperm.xlu0 %882, %v865
          %v884 = vpop.permute.xlu0 %883
          %v886 = vrcp.pop %v869
          %v887 = vmul.f32 %v858, %v886
          %v888 = vrcp.pop %v874
          %v889 = vmul.f32 %v859, %v888
          %v890 = vrcp.pop %v879
          %v891 = vmul.f32 %v860, %v890
          %v892 = vrcp.pop %v884
          %v893 = vmul.f32 %v861, %v892
          %v894 = vpack.c.bf16 %v887, %v887
          %v895 = vpack.c.bf16 %v889, %v889
          %v896 = vpack.c.bf16 %v891, %v891
          %v897 = vpack.c.bf16 %v893, %v893
          %vm898 = vcmask 60416
          %899 = vst.msk [vmem:[#allocation5] sm:$0xf] %vm898, %v894
          %v901 = vunpack.c.l.b16 %v895
          %v902 = vpack.c.b16 %v901, %v901
          %903 = vrot.lane.b32.xlu0 %v902, 8
          %v904 = vpop.permute.xlu0 %903
          %vm906 = vcmask 126016
          %907 = vst.msk [vmem:[#allocation5] sm:$0xf] %vm906, %v904
          %v909 = vunpack.c.l.b16 %v896
          %v910 = vpack.c.b16 %v909, %v909
          %911 = vrot.lane.b32.xlu0 %v910, 16
          %v912 = vpop.permute.xlu0 %911
          %vm914 = vcmask 191616
          %915 = vst.msk [vmem:[#allocation5] sm:$0xf] %vm914, %v912
          %v917 = vunpack.c.l.b16 %v897
          %v918 = vpack.c.b16 %v917, %v917
          %919 = vrot.lane.b32.xlu0 %v918, 24
          %v920 = vpop.permute.xlu0 %919
          %vm922 = vcmask 257216
          %923 = vst.msk [vmem:[#allocation5] sm:$0xf] %vm922, %v920
          %v924 = vld [vmem:[#allocation5] sm:$0xf]
          %v925 = vld [vmem:[%s3] sm:$0xf]
          %v926 = vld [vmem:[%s3 + $0x4] sm:$0xf]
          %v927 = vld [vmem:[%s3 + $0x8] sm:$0xf]
          %v928 = vld [vmem:[%s3 + $0xc] sm:$0xf]
          %v929 = vld [vmem:[%s4] sm:$0x1]
          %v931 = vlaneseq
          %v932 = vshrl.u32 %v931, 7
          %v933 = vsub.s32 0, %v932
          %v934 = vrot.slane %v929, %v933
          %v940 = vunpack.c.l.b16 %v925
          %v941 = vunpack.c.l.b16 %v926
          %v942 = vunpack.c.l.b16 %v927
          %v943 = vunpack.c.l.b16 %v928
          %v944 = vpack.c.b16 %v941, %v940
          %v945 = vpack.c.b16 %v943, %v942
          %vm948 = vcmask 261120
          %v950 = vsel %vm948, %v924, 0
          %952 = vmatprep.subr.bf16.mxu0 0
          %953 = vmatpush1.bf16.msra.mxu0 %v944
          %954 = vmatprep.subr.bf16.mxu0 0
          %955 = vmatpush1.bf16.msra.mxu0 %v945
          %956 = vmatprep.subr.bf16.mxu0 0
          %957 = vmatpush1.bf16.msra.mxu0 0
          %958 = vmatprep.subr.bf16.mxu0 0
          %959 = vmatpush1.bf16.msra.mxu0 0
          %960 = vmatprep.subr.bf16.mxu0 0
          %961 = vmatpush1.bf16.msra.mxu0 0
          %962 = vmatprep.subr.bf16.mxu0 0
          %963 = vmatpush1.bf16.msra.mxu0 0
          %964 = vmatprep.subr.bf16.mxu0 0
          %965 = vmatpush1.bf16.msra.mxu0 0
          %966 = vmatprep.subr.bf16.mxu0 0
          %967 = vmatpush1.bf16.msra.mxu0 0
          %968 = vmatprep.subr.bf16.mxu0 0
          %969 = vmatpush1.bf16.msra.mxu0 0
          %970 = vmatprep.subr.bf16.mxu0 0
          %971 = vmatpush1.bf16.msra.mxu0 0
          %972 = vmatprep.subr.bf16.mxu0 0
          %973 = vmatpush1.bf16.msra.mxu0 0
          %974 = vmatprep.subr.bf16.mxu0 0
          %975 = vmatpush1.bf16.msra.mxu0 0
          %976 = vmatprep.subr.bf16.mxu0 0
          %977 = vmatpush1.bf16.msra.mxu0 0
          %978 = vmatprep.subr.bf16.mxu0 0
          %979 = vmatpush1.bf16.msra.mxu0 0
          %980 = vmatprep.subr.bf16.mxu0 0
          %981 = vmatpush1.bf16.msra.mxu0 0
          %982 = vmatprep.subr.bf16.mxu0 0
          %983 = vmatpush1.bf16.msra.mxu0 0
          %984 = vmatprep.mubr.bf16.mxu0 0
          %985 = vmatmul.mubr.bf16.gmra.mrb[0].mxu0 %v950
          %v986 = vpop.f32.mrb[0].mxu0
          %v987 = vadd.f32 %v934, %v986
          %v988 = vpop.f32.mrb[0].mxu0
          %v989 = vpop.f32.mrb[0].mxu0
          %v990 = vpop.f32.mrb[0].mxu0
          %991 = vdwg.mxu0
          %992 = vst.msk [vmem:[%s292] sm:$0xff] %vm948, %v987
        $region48: #{multi_head_self_attention.3} parent=39 // pred_fallthru
          _
        %s993 = sand.u32 %s174, 1
        %s994 = scalar_lea.sflag [#allocation7], %s993
        %s995 = sand.u32 %s174, 1
        %s996 = smul.addr %s995, 8
        %s997 = scalar_lea.vmem [#allocation6], %s996
        // Predicated region
        $region49: #{multi_head_self_attention.3} parent=39 // pred_check
          %p998 = pneg %p184
        $region50: #{multi_head_self_attention.3} parent=39 // pred_check_branch
          %1000 = sbr.rel (%p998) target = $region52
        $region51: #{multi_head_self_attention.3} parent=39 // pred_region
          %s1002 = ssub.s32 128, 128
          %1003 = vsyncadd %s994, %s1002
          %s1004 = sadd.s32 %s25, %s24
          %s1005 = smul.addr %s1004, 128
          %s1006 = scalar_lea.hbm %s5, %s1005
          %s1008 = sshll.u32 %s997, 4
          %s1009 = int_to_ptr.vmem [resolvable:$true] %s1008
          %1011 = dma.vmem_to_hbm [thread:$0]  %s1009, 128, %s1006, %s994
        $region52: #{multi_head_self_attention.3} parent=39 // pred_fallthru
          _
      $region40: #{multi_head_self_attention.3} parent=5 // pred_fallthru
        _
      %p1012 = scmp.le.s32.totalorder 2, %s14
      // Predicated region
      $region53: #{multi_head_self_attention.3} parent=5 // pred_check
        %p1013 = pneg %p1012
      $region54: #{multi_head_self_attention.3} parent=5 // pred_check_branch
        %1015 = sbr.rel (%p1013) target = $region56
      $region55: #{multi_head_self_attention.3} parent=5 // pred_region
        %s1016 = ssub.s32 %s14, 2
        // Predicated region
        $region57: #{multi_head_self_attention.3} parent=55 // pred_check
          %p1017 = pneg %p190
        $region58: #{multi_head_self_attention.3} parent=55 // pred_check_branch
          %1019 = sbr.rel (%p1017) target = $region60
        $region59: #{multi_head_self_attention.3} parent=55 // pred_region
          %s1020 = sand.u32 %s175, 1
          %s1021 = scalar_lea.sflag [#allocation7], %s1020
          %s1022 = sand.u32 %s175, 1
          %s1023 = smul.addr %s1022, 8
          %s1024 = scalar_lea.vmem [#allocation6], %s1023
          %1025 = dma.done %s1021, 128
        $region60: #{multi_head_self_attention.3} parent=55 // pred_fallthru
          _
      $region56: #{multi_head_self_attention.3} parent=5 // pred_fallthru
        _
    $region6: #{multi_head_self_attention.3} parent=1 // loop_footer
      %s18 = sadd.s32 1, %s14
    $region7: #{multi_head_self_attention.3} parent=1 // loop_footer_branch
      %13 = sbr.rel target = $region3
    $region8: #{multi_head_self_attention.3} parent=1 // loop_exit
      _
    %1026 = vsyncpa [#allocation7], 1
    %s1027 = scalar_lea.sflag [#allocation7], 1
    %1028 = vsyncpa %s1027, 1

</llo_original>
